<compile_context>
chip_gen: v6e
topology: v6e:2x2x1
jax: 0.10.0
libtpu: 0.0.40
codegen_flags: <defaults>
</compile_context>

<pallas_src>
import functools

import jax
import jax.numpy as jnp
from jax import lax
from jax.experimental import pallas as pl
from jax.experimental.pallas import tpu as pltpu


# ---------------------------------------------------------------------------
# Helpers
# ---------------------------------------------------------------------------
def _round_up(x, m):
    return ((x + m - 1) // m) * m


def _tpu_vmem_capacity_bytes():
    """Physical per-core VMEM (v5e/v6e: 128 MiB, v7x: 64 MiB); safe fallback."""
    try:
        info = pltpu.get_tpu_info()
        cap = int(getattr(info, "vmem_capacity_bytes", 0) or 0)
        if cap > 0:
            return cap
    except Exception:
        pass
    return 64 << 20  # conservative: v7x per-TensorCore VMEM


def _vmem_budget_bytes():
    """Working-set budget used for tile sizing (~1/4 of physical VMEM)."""
    cap = _tpu_vmem_capacity_bytes()
    return int(min(max(cap // 4, 8 << 20), 48 << 20))


def _vmem_limit_bytes():
    """Scoped VMEM limit handed to Mosaic (headroom left for internal scratch)."""
    cap = _tpu_vmem_capacity_bytes()
    return int(min(cap // 2, 96 << 20))


# ---------------------------------------------------------------------------
# Path 1: implicit im2col (stride == 1).  One grid step per image.
#   x_ref : (2Cin, Lx)            compute dtype, flattened zero-padded image
#   w_ref : (KH*KW, 2Cout, 2Cin)  compute dtype, per-tap stacked complex weight
#   b_ref : (2Cout, 1)            f32, rows = (br - bi, br + bi)
#   y_ref : (2Cout, Lout)         output in the padded-width frame
# For stride 1, output pixel (oh, ow) lives at flat index j = oh*Wp + ow and
# tap (kh, kw) reads flat index j + (kh*DH*Wp + kw*DW): every tap is one lane
# roll of the image followed by a (2Cout,2Cin) x (2Cin,Lout) matmul, f32 acc.
# Columns with ow >= OW are garbage and stripped by the wrapper.
# ---------------------------------------------------------------------------
def _implicit_conv_kernel(x_ref, w_ref, b_ref, y_ref, *, offsets, lout):
    x = x_ref[...]
    lx = x_ref.shape[1]
    acc = jnp.zeros((y_ref.shape[0], lout), jnp.float32)
    for t, off in enumerate(offsets):
        xt = x if off == 0 else pltpu.roll(x, lx - off, 1)
        acc = acc + jnp.dot(w_ref[t], xt[:, :lout],
                            preferred_element_type=jnp.float32)
    y_ref[...] = (acc + b_ref[...]).astype(y_ref.dtype)


def _complex_conv_implicit(xr, xi, wr, wi, br, bi, *, padding, dilation,
                           compute_dtype, out_dtype, budget, vmem_limit):
    N, Cin, H, W = xr.shape
    Cout, _, KH, KW = wr.shape
    PH, PW = padding
    DH, DW = dilation
    Hp, Wp = H + 2 * PH, W + 2 * PW
    OH = Hp - DH * (KH - 1)
    OW = Wp - DW * (KW - 1)
    T = KH * KW
    Cin2, Cout2 = 2 * Cin, 2 * Cout

    lout = _round_up(OH * Wp, 128)
    off_max = (KH - 1) * DH * Wp + (KW - 1) * DW
    lx = _round_up(off_max + lout, 128)

    csize = jnp.dtype(compute_dtype).itemsize
    osize = jnp.dtype(out_dtype).itemsize
    need = (2 * Cin2 * lx * csize          # double-buffered x tile
            + 2 * Cout2 * lout * osize     # double-buffered y tile
            + Cout2 * lout * 4             # f32 accumulator
            + Cin2 * lx * csize            # rolled temporary
            + T * Cout2 * Cin2 * csize + Cout2 * 4)
    if 2 * need > budget:                  # 2x headroom for Mosaic scratch
        # TODO(synk): halo'd row-band tiling (manual DMA) for images too large
        # to sit whole in VMEM; fall back to the patches path for now.
        return None

    # Stacked real/imag input, zero-padded spatially, flattened to lanes.
    x2 = jnp.concatenate([xr, xi], axis=1)                   # (N, 2Cin, H, W)
    xp = jnp.pad(x2, ((0, 0), (0, 0), (PH, PH), (PW, PW)))   # (N, 2Cin, Hp, Wp)
    x_flat = xp.reshape(N, Cin2, Hp * Wp)
    x_flat = jnp.pad(x_flat, ((0, 0), (0, 0), (0, lx - Hp * Wp)))
    x_flat = x_flat.astype(compute_dtype)

    # Per-tap stacked complex weights (T, 2Cout, 2Cin), tap order kh-major.
    wr_t = jnp.transpose(wr.astype(jnp.float32), (2, 3, 0, 1)).reshape(T, Cout, Cin)
    wi_t = jnp.transpose(wi.astype(jnp.float32), (2, 3, 0, 1)).reshape(T, Cout, Cin)
    w_all = jnp.concatenate([
        jnp.concatenate([wr_t, -wi_t], axis=2),   # -> real output rows
        jnp.concatenate([wi_t,  wr_t], axis=2),   # -> imag output rows
    ], axis=1).astype(compute_dtype)              # (T, 2Cout, 2Cin)
    b_all = jnp.concatenate([br - bi, br + bi]).reshape(Cout2, 1)
    b_all = b_all.astype(jnp.float32)

    offsets = tuple(kh * DH * Wp + kw * DW
                    for kh in range(KH) for kw in range(KW))
    kernel = functools.partial(_implicit_conv_kernel, offsets=offsets, lout=lout)

    y = pl.pallas_call(
        kernel,
        out_shape=jax.ShapeDtypeStruct((N, Cout2, lout), out_dtype),
        grid_spec=pltpu.PrefetchScalarGridSpec(
            num_scalar_prefetch=0,
            grid=(N,),
            in_specs=[
                pl.BlockSpec((None, Cin2, lx), lambda n: (n, 0, 0)),
                pl.BlockSpec((T, Cout2, Cin2), lambda n: (0, 0, 0)),
                pl.BlockSpec((Cout2, 1), lambda n: (0, 0)),
            ],
            out_specs=pl.BlockSpec((None, Cout2, lout), lambda n: (n, 0, 0)),
        ),
        compiler_params=pltpu.CompilerParams(
            dimension_semantics=("parallel",),
            vmem_limit_bytes=vmem_limit),
    )(x_flat, w_all, b_all)

    # Strip padded-frame garbage columns; stays batch/channel-major (NCHW).
    y = y[:, :, :OH * Wp].reshape(N, Cout2, OH, Wp)[:, :, :, :OW]
    y = y.astype(jnp.float32)
    return y[:, :Cout], y[:, Cout:]


# ---------------------------------------------------------------------------
# Path 2 (fallback: strided/dilated or VMEM-overflow cases):
# one stacked complex matmul over host-extracted patches + f32 bias epilogue.
#   x_ref : (K2, THW)    compute dtype (K2 = 2*Cin*KH*KW padded to sublane mult)
#   w_ref : (2Cout, K2)  compute dtype
#   b_ref : (2Cout, 1)   f32
#   y_ref : (2Cout, THW) out dtype (rows: real channels then imag channels)
# ---------------------------------------------------------------------------
def _patches_matmul_kernel(x_ref, w_ref, b_ref, y_ref):
    y = jnp.dot(w_ref[...], x_ref[...], preferred_element_type=jnp.float32)
    y_ref[...] = (y + b_ref[...]).astype(y_ref.dtype)


def _pick_hw_tile(m_pad, x_rows, y_rows, x_itemsize, y_itemsize, budget):
    """Largest lane tile (multiple of 128, <= 2048, <= m_pad) such that the
    double-buffered X/Y tiles + resident W/bias fit the VMEM budget."""
    t = min(2048, m_pad)
    while t > 128:
        need = (2 * t * (x_rows * x_itemsize + y_rows * y_itemsize)
                + x_rows * y_rows * x_itemsize + y_rows * 4)
        if 2 * need <= budget:
            return t
        t -= 128
    return 128


def _complex_conv_patches(xr, xi, wr, wi, br, bi, *, stride, padding, dilation,
                          compute_dtype, out_dtype, budget, vmem_limit):
    N, Cin, H, W = xr.shape
    Cout, _, KH, KW = wr.shape
    K = Cin * KH * KW
    SH, SW = stride
    PH, PW = padding
    DH, DW = dilation
    OH = (H + 2 * PH - DH * (KH - 1) - 1) // SH + 1
    OW = (W + 2 * PW - DW * (KW - 1) - 1) // SW + 1
    OHW = OH * OW
    Cout2 = 2 * Cout

    csize = jnp.dtype(compute_dtype).itemsize
    osize = jnp.dtype(out_dtype).itemsize
    sub = 8 * (4 // csize)                # sublane packing: 8 (f32) / 16 (bf16)
    K2 = _round_up(2 * K, sub)
    # TODO(synk): add a K ("arbitrary") grid axis + f32 accumulator scratch so
    # very large Cin does not force the whole contraction resident per tile.

    # Host-side im2col (only used for strided/dilated cases).  Row order is
    # channel-major then (kh, kw), matching OIHW weight flattening.
    x2 = jnp.concatenate([xr, xi], axis=1)
    xp = jnp.pad(x2, ((0, 0), (0, 0), (PH, PH), (PW, PW)))
    taps = []
    for kh in range(KH):
        for kw in range(KW):
            h0, w0 = kh * DH, kw * DW
            sl = xp[:, :, h0:h0 + (OH - 1) * SH + 1:SH,
                          w0:w0 + (OW - 1) * SW + 1:SW]       # (N, 2Cin, OH, OW)
            taps.append(sl.reshape(N, 2 * Cin, OHW))
    x_all = jnp.stack(taps, axis=2).reshape(N, 2 * K, OHW)    # rows: Xr then Xi

    Mpad0 = _round_up(OHW, 128)
    thw = _pick_hw_tile(Mpad0, K2, Cout2, csize, osize, budget)
    Mpad = _round_up(Mpad0, thw)          # pad up to tile multiple (no divisor req.)

    x_all = jnp.pad(x_all, ((0, 0), (0, K2 - 2 * K), (0, Mpad - OHW)))
    x_all = x_all.astype(compute_dtype)

    wr_flat = wr.reshape(Cout, K).astype(jnp.float32)
    wi_flat = wi.reshape(Cout, K).astype(jnp.float32)
    w_all = jnp.concatenate([
        jnp.concatenate([wr_flat, -wi_flat], axis=1),   # -> real output rows
        jnp.concatenate([wi_flat,  wr_flat], axis=1),   # -> imag output rows
    ], axis=0)                                          # (2Cout, 2K)
    w_all = jnp.pad(w_all, ((0, 0), (0, K2 - 2 * K))).astype(compute_dtype)
    b_all = jnp.concatenate([br - bi, br + bi]).reshape(Cout2, 1)
    b_all = b_all.astype(jnp.float32)

    grid = (N, Mpad // thw)
    y = pl.pallas_call(
        _patches_matmul_kernel,
        out_shape=jax.ShapeDtypeStruct((N, Cout2, Mpad), out_dtype),
        grid_spec=pltpu.PrefetchScalarGridSpec(
            num_scalar_prefetch=0,
            grid=grid,
            in_specs=[
                pl.BlockSpec((None, K2, thw), lambda n, t: (n, 0, t)),
                pl.BlockSpec((Cout2, K2), lambda n, t: (0, 0)),
                pl.BlockSpec((Cout2, 1), lambda n, t: (0, 0)),
            ],
            out_specs=pl.BlockSpec((None, Cout2, thw), lambda n, t: (n, 0, t)),
        ),
        compiler_params=pltpu.CompilerParams(
            dimension_semantics=("parallel", "parallel"),
            vmem_limit_bytes=vmem_limit),
    )(x_all, w_all, b_all)

    y = y[:, :, :OHW].reshape(N, Cout2, OH, OW).astype(jnp.float32)
    return y[:, :Cout], y[:, Cout:]


# ---------------------------------------------------------------------------
# complex_conv2d forward
# ---------------------------------------------------------------------------
def complex_conv2d_forward(x_complex, wr_oihw, wi_oihw, br, bi, *,
                           stride, padding, dilation, groups,
                           compute_dtype=jnp.bfloat16,
                           out_dtype=jnp.float32):
    assert groups == 1, "groups != 1 not supported in this kernel"
    # TODO(synk): grouped complex conv (groups > 1) not implemented.
    # TODO(synk): optional fp8 (e4m3) X/W stream for v7x (memory-bound layers).
    xr = jnp.real(x_complex).astype(jnp.float32)
    xi = jnp.imag(x_complex).astype(jnp.float32)

    budget = _vmem_budget_bytes()
    vmem_limit = _vmem_limit_bytes()

    yr = yi = None
    if tuple(stride) == (1, 1):
        res = _complex_conv_implicit(
            xr, xi, wr_oihw, wi_oihw, br, bi,
            padding=padding, dilation=dilation,
            compute_dtype=compute_dtype, out_dtype=out_dtype,
            budget=budget, vmem_limit=vmem_limit)
        if res is not None:
            yr, yi = res
    if yr is None:
        yr, yi = _complex_conv_patches(
            xr, xi, wr_oihw, wi_oihw, br, bi,
            stride=stride, padding=padding, dilation=dilation,
            compute_dtype=compute_dtype, out_dtype=out_dtype,
            budget=budget, vmem_limit=vmem_limit)
    return lax.complex(yr, yi)


def _ref_forward(x_complex, wr, wi, br, bi, *, stride, padding, dilation):
    """Pure-JAX reference (lax.conv) mirroring the PyTorch module exactly."""
    def conv(x, w, b):
        y = lax.conv_general_dilated(
            x, w, window_strides=stride,
            padding=[(padding[0], padding[0]), (padding[1], padding[1])],
            rhs_dilation=dilation,
            dimension_numbers=("NCHW", "OIHW", "NCHW"))
        return y + b.reshape(1, -1, 1, 1)
    xr = jnp.real(x_complex).astype(jnp.float32)
    xi = jnp.imag(x_complex).astype(jnp.float32)
    real_out = conv(xr, wr, br) - conv(xi, wi, bi)
    imag_out = conv(xi, wr, br) + conv(xr, wi, bi)
    return lax.complex(real_out, imag_out)


if __name__ == "__main__":
    # Module config: complex_conv2d(in_channels=4, out_channels=8, kernel_size=3,
    #                               stride=1, padding=1, dilation=1, groups=1, bias=True)
    in_channels, out_channels = 4, 8
    kernel_size = (3, 3)
    dilation = (1, 1)
    groups = 1

    key = jax.random.PRNGKey(0)
    k_xr, k_xi, k_wr, k_wi, k_br, k_bi = jax.random.split(key, 6)

    N, H, W = 2, 16, 16
    xr0 = jax.random.normal(k_xr, (N, in_channels, H, W), jnp.float32)
    xi0 = jax.random.normal(k_xi, (N, in_channels, H, W), jnp.float32)
    x = lax.complex(xr0, xi0)  # complex64, NCHW

    wshape = (out_channels, in_channels, kernel_size[0], kernel_size[1])
    wr = jax.random.normal(k_wr, wshape, jnp.float32) * 0.1
    wi = jax.random.normal(k_wi, wshape, jnp.float32) * 0.1
    br = jax.random.normal(k_br, (out_channels,), jnp.float32) * 0.1
    bi = jax.random.normal(k_bi, (out_channels,), jnp.float32) * 0.1

    # ---- stride=1 (module config): implicit-im2col Pallas path ------------
    stride, padding = (1, 1), (1, 1)
    ref = jax.block_until_ready(_ref_forward(
        x, wr, wi, br, bi, stride=stride, padding=padding, dilation=dilation))

    fwd_f32 = jax.jit(functools.partial(
        complex_conv2d_forward, stride=stride, padding=padding,
        dilation=dilation, groups=groups, compute_dtype=jnp.float32))
    out_f32 = jax.block_until_ready(fwd_f32(x, wr, wi, br, bi))
    assert out_f32.shape == (N, out_channels, H, W), out_f32.shape
    assert out_f32.dtype == jnp.complex64, out_f32.dtype
    assert jnp.allclose(jnp.real(out_f32), jnp.real(ref), atol=1e-4, rtol=1e-4)
    assert jnp.allclose(jnp.imag(out_f32), jnp.imag(ref), atol=1e-4, rtol=1e-4)

    fwd_bf16 = jax.jit(functools.partial(
        complex_conv2d_forward, stride=stride, padding=padding,
        dilation=dilation, groups=groups, compute_dtype=jnp.bfloat16))
    out_bf16 = jax.block_until_ready(fwd_bf16(x, wr, wi, br, bi))
    assert out_bf16.shape == (N, out_channels, H, W), out_bf16.shape
    assert jnp.allclose(jnp.real(out_bf16), jnp.real(ref), atol=5e-2, rtol=5e-2)
    assert jnp.allclose(jnp.imag(out_bf16), jnp.imag(ref), atol=5e-2, rtol=5e-2)

    # ---- stride=2: patches/stacked-matmul fallback path --------------------
    stride2, padding2 = (2, 2), (1, 1)
    ref2 = jax.block_until_ready(_ref_forward(
        x, wr, wi, br, bi, stride=stride2, padding=padding2, dilation=dilation))
    fwd_s2 = jax.jit(functools.partial(
        complex_conv2d_forward, stride=stride2, padding=padding2,
        dilation=dilation, groups=groups, compute_dtype=jnp.float32))
    out_s2 = jax.block_until_ready(fwd_s2(x, wr, wi, br, bi))
    assert out_s2.shape == (N, out_channels, 8, 8), out_s2.shape
    assert out_s2.dtype == jnp.complex64, out_s2.dtype
    assert jnp.allclose(jnp.real(out_s2), jnp.real(ref2), atol=1e-4, rtol=1e-4)
    assert jnp.allclose(jnp.imag(out_s2), jnp.imag(ref2), atol=1e-4, rtol=1e-4)

    print("KERNEL_OK")
</pallas_src>

<mosaic_0001>
module attributes {stable_mosaic.version = 11 : i64} {
  func.func @_implicit_conv_kernel(%arg0: i32, %arg1: memref<1x8x512xf32, #tpu.memory_space<vmem>>, %arg2: memref<9x16x8xf32, #tpu.memory_space<vmem>>, %arg3: memref<16x1xf32, #tpu.memory_space<vmem>>, %arg4: memref<1x16x384xf32, #tpu.memory_space<vmem>>) attributes {dimension_semantics = [#tpu.dimension_semantics<parallel>], iteration_bounds = array<i64: 2>, scalar_prefetch = 0 : i64, scratch_operands = 0 : i64, tpu.core_type = #tpu.core_type<tc>, window_params = [{transform_indices = @transform_0, window_bounds = array<i64: 1, 8, 512>}, {pipeline_mode = #tpu.pipeline_mode<synchronous>, transform_indices = @transform_1, window_bounds = array<i64: 9, 16, 8>}, {pipeline_mode = #tpu.pipeline_mode<synchronous>, transform_indices = @transform_2, window_bounds = array<i64: 16, 1>}, {transform_indices = @transform_3, window_bounds = array<i64: 1, 16, 384>}]} {
    %c0 = arith.constant 0 : index
    %c0_0 = arith.constant 0 : index
    %c0_1 = arith.constant 0 : index
    %0 = vector.load %arg1[%c0, %c0_0, %c0_1] : memref<1x8x512xf32, #tpu.memory_space<vmem>>, vector<1x8x512xf32>
    %1 = vector.shape_cast %0 : vector<1x8x512xf32> to vector<8x512xf32>
    %cst = arith.constant 0.000000e+00 : f32
    %2 = vector.broadcast %cst : f32 to vector<16x384xf32>
    %c0_2 = arith.constant 0 : index
    %c0_3 = arith.constant 0 : index
    %c0_4 = arith.constant 0 : index
    %3 = vector.load %arg2[%c0_2, %c0_3, %c0_4] : memref<9x16x8xf32, #tpu.memory_space<vmem>>, vector<1x16x8xf32>
    %4 = vector.shape_cast %3 : vector<1x16x8xf32> to vector<16x8xf32>
    %5 = vector.extract_strided_slice %1 {offsets = [0, 0], sizes = [8, 384], strides = [1, 1]} : vector<8x512xf32> to vector<8x384xf32>
    %cst_5 = arith.constant dense<0.000000e+00> : vector<16x384xf32>
    %6 = tpu.matmul %4, %5, %cst_5 {dimension_numbers = #tpu.dot_dimension_numbers<[1], [0], [0], [1], [0, 0, 1, 1], [], []>} : vector<16x8xf32>, vector<8x384xf32>, vector<16x384xf32> -> vector<16x384xf32>
    %7 = arith.addf %2, %6 : vector<16x384xf32>
    %c511_i32 = arith.constant 511 : i32
    %8 = tpu.dynamic_rotate %1 by %c511_i32 dim 1 : vector<8x512xf32>, i32 -> vector<8x512xf32>
    %c1 = arith.constant 1 : index
    %c0_6 = arith.constant 0 : index
    %c0_7 = arith.constant 0 : index
    %9 = vector.load %arg2[%c1, %c0_6, %c0_7] : memref<9x16x8xf32, #tpu.memory_space<vmem>>, vector<1x16x8xf32>
    %10 = vector.shape_cast %9 : vector<1x16x8xf32> to vector<16x8xf32>
    %11 = vector.extract_strided_slice %8 {offsets = [0, 0], sizes = [8, 384], strides = [1, 1]} : vector<8x512xf32> to vector<8x384xf32>
    %cst_8 = arith.constant dense<0.000000e+00> : vector<16x384xf32>
    %12 = tpu.matmul %10, %11, %cst_8 {dimension_numbers = #tpu.dot_dimension_numbers<[1], [0], [0], [1], [0, 0, 1, 1], [], []>} : vector<16x8xf32>, vector<8x384xf32>, vector<16x384xf32> -> vector<16x384xf32>
    %13 = arith.addf %7, %12 : vector<16x384xf32>
    %c510_i32 = arith.constant 510 : i32
    %14 = tpu.dynamic_rotate %1 by %c510_i32 dim 1 : vector<8x512xf32>, i32 -> vector<8x512xf32>
    %c2 = arith.constant 2 : index
    %c0_9 = arith.constant 0 : index
    %c0_10 = arith.constant 0 : index
    %15 = vector.load %arg2[%c2, %c0_9, %c0_10] : memref<9x16x8xf32, #tpu.memory_space<vmem>>, vector<1x16x8xf32>
    %16 = vector.shape_cast %15 : vector<1x16x8xf32> to vector<16x8xf32>
    %17 = vector.extract_strided_slice %14 {offsets = [0, 0], sizes = [8, 384], strides = [1, 1]} : vector<8x512xf32> to vector<8x384xf32>
    %cst_11 = arith.constant dense<0.000000e+00> : vector<16x384xf32>
    %18 = tpu.matmul %16, %17, %cst_11 {dimension_numbers = #tpu.dot_dimension_numbers<[1], [0], [0], [1], [0, 0, 1, 1], [], []>} : vector<16x8xf32>, vector<8x384xf32>, vector<16x384xf32> -> vector<16x384xf32>
    %19 = arith.addf %13, %18 : vector<16x384xf32>
    %c494_i32 = arith.constant 494 : i32
    %20 = tpu.dynamic_rotate %1 by %c494_i32 dim 1 : vector<8x512xf32>, i32 -> vector<8x512xf32>
    %c3 = arith.constant 3 : index
    %c0_12 = arith.constant 0 : index
    %c0_13 = arith.constant 0 : index
    %21 = vector.load %arg2[%c3, %c0_12, %c0_13] : memref<9x16x8xf32, #tpu.memory_space<vmem>>, vector<1x16x8xf32>
    %22 = vector.shape_cast %21 : vector<1x16x8xf32> to vector<16x8xf32>
    %23 = vector.extract_strided_slice %20 {offsets = [0, 0], sizes = [8, 384], strides = [1, 1]} : vector<8x512xf32> to vector<8x384xf32>
    %cst_14 = arith.constant dense<0.000000e+00> : vector<16x384xf32>
    %24 = tpu.matmul %22, %23, %cst_14 {dimension_numbers = #tpu.dot_dimension_numbers<[1], [0], [0], [1], [0, 0, 1, 1], [], []>} : vector<16x8xf32>, vector<8x384xf32>, vector<16x384xf32> -> vector<16x384xf32>
    %25 = arith.addf %19, %24 : vector<16x384xf32>
    %c493_i32 = arith.constant 493 : i32
    %26 = tpu.dynamic_rotate %1 by %c493_i32 dim 1 : vector<8x512xf32>, i32 -> vector<8x512xf32>
    %c4 = arith.constant 4 : index
    %c0_15 = arith.constant 0 : index
    %c0_16 = arith.constant 0 : index
    %27 = vector.load %arg2[%c4, %c0_15, %c0_16] : memref<9x16x8xf32, #tpu.memory_space<vmem>>, vector<1x16x8xf32>
    %28 = vector.shape_cast %27 : vector<1x16x8xf32> to vector<16x8xf32>
    %29 = vector.extract_strided_slice %26 {offsets = [0, 0], sizes = [8, 384], strides = [1, 1]} : vector<8x512xf32> to vector<8x384xf32>
    %cst_17 = arith.constant dense<0.000000e+00> : vector<16x384xf32>
    %30 = tpu.matmul %28, %29, %cst_17 {dimension_numbers = #tpu.dot_dimension_numbers<[1], [0], [0], [1], [0, 0, 1, 1], [], []>} : vector<16x8xf32>, vector<8x384xf32>, vector<16x384xf32> -> vector<16x384xf32>
    %31 = arith.addf %25, %30 : vector<16x384xf32>
    %c492_i32 = arith.constant 492 : i32
    %32 = tpu.dynamic_rotate %1 by %c492_i32 dim 1 : vector<8x512xf32>, i32 -> vector<8x512xf32>
    %c5 = arith.constant 5 : index
    %c0_18 = arith.constant 0 : index
    %c0_19 = arith.constant 0 : index
    %33 = vector.load %arg2[%c5, %c0_18, %c0_19] : memref<9x16x8xf32, #tpu.memory_space<vmem>>, vector<1x16x8xf32>
    %34 = vector.shape_cast %33 : vector<1x16x8xf32> to vector<16x8xf32>
    %35 = vector.extract_strided_slice %32 {offsets = [0, 0], sizes = [8, 384], strides = [1, 1]} : vector<8x512xf32> to vector<8x384xf32>
    %cst_20 = arith.constant dense<0.000000e+00> : vector<16x384xf32>
    %36 = tpu.matmul %34, %35, %cst_20 {dimension_numbers = #tpu.dot_dimension_numbers<[1], [0], [0], [1], [0, 0, 1, 1], [], []>} : vector<16x8xf32>, vector<8x384xf32>, vector<16x384xf32> -> vector<16x384xf32>
    %37 = arith.addf %31, %36 : vector<16x384xf32>
    %c476_i32 = arith.constant 476 : i32
    %38 = tpu.dynamic_rotate %1 by %c476_i32 dim 1 : vector<8x512xf32>, i32 -> vector<8x512xf32>
    %c6 = arith.constant 6 : index
    %c0_21 = arith.constant 0 : index
    %c0_22 = arith.constant 0 : index
    %39 = vector.load %arg2[%c6, %c0_21, %c0_22] : memref<9x16x8xf32, #tpu.memory_space<vmem>>, vector<1x16x8xf32>
    %40 = vector.shape_cast %39 : vector<1x16x8xf32> to vector<16x8xf32>
    %41 = vector.extract_strided_slice %38 {offsets = [0, 0], sizes = [8, 384], strides = [1, 1]} : vector<8x512xf32> to vector<8x384xf32>
    %cst_23 = arith.constant dense<0.000000e+00> : vector<16x384xf32>
    %42 = tpu.matmul %40, %41, %cst_23 {dimension_numbers = #tpu.dot_dimension_numbers<[1], [0], [0], [1], [0, 0, 1, 1], [], []>} : vector<16x8xf32>, vector<8x384xf32>, vector<16x384xf32> -> vector<16x384xf32>
    %43 = arith.addf %37, %42 : vector<16x384xf32>
    %c475_i32 = arith.constant 475 : i32
    %44 = tpu.dynamic_rotate %1 by %c475_i32 dim 1 : vector<8x512xf32>, i32 -> vector<8x512xf32>
    %c7 = arith.constant 7 : index
    %c0_24 = arith.constant 0 : index
    %c0_25 = arith.constant 0 : index
    %45 = vector.load %arg2[%c7, %c0_24, %c0_25] : memref<9x16x8xf32, #tpu.memory_space<vmem>>, vector<1x16x8xf32>
    %46 = vector.shape_cast %45 : vector<1x16x8xf32> to vector<16x8xf32>
    %47 = vector.extract_strided_slice %44 {offsets = [0, 0], sizes = [8, 384], strides = [1, 1]} : vector<8x512xf32> to vector<8x384xf32>
    %cst_26 = arith.constant dense<0.000000e+00> : vector<16x384xf32>
    %48 = tpu.matmul %46, %47, %cst_26 {dimension_numbers = #tpu.dot_dimension_numbers<[1], [0], [0], [1], [0, 0, 1, 1], [], []>} : vector<16x8xf32>, vector<8x384xf32>, vector<16x384xf32> -> vector<16x384xf32>
    %49 = arith.addf %43, %48 : vector<16x384xf32>
    %c474_i32 = arith.constant 474 : i32
    %50 = tpu.dynamic_rotate %1 by %c474_i32 dim 1 : vector<8x512xf32>, i32 -> vector<8x512xf32>
    %c8 = arith.constant 8 : index
    %c0_27 = arith.constant 0 : index
    %c0_28 = arith.constant 0 : index
    %51 = vector.load %arg2[%c8, %c0_27, %c0_28] : memref<9x16x8xf32, #tpu.memory_space<vmem>>, vector<1x16x8xf32>
    %52 = vector.shape_cast %51 : vector<1x16x8xf32> to vector<16x8xf32>
    %53 = vector.extract_strided_slice %50 {offsets = [0, 0], sizes = [8, 384], strides = [1, 1]} : vector<8x512xf32> to vector<8x384xf32>
    %cst_29 = arith.constant dense<0.000000e+00> : vector<16x384xf32>
    %54 = tpu.matmul %52, %53, %cst_29 {dimension_numbers = #tpu.dot_dimension_numbers<[1], [0], [0], [1], [0, 0, 1, 1], [], []>} : vector<16x8xf32>, vector<8x384xf32>, vector<16x384xf32> -> vector<16x384xf32>
    %55 = arith.addf %49, %54 : vector<16x384xf32>
    %c0_30 = arith.constant 0 : index
    %c0_31 = arith.constant 0 : index
    %56 = vector.load %arg3[%c0_30, %c0_31] : memref<16x1xf32, #tpu.memory_space<vmem>>, vector<16x1xf32>
    %57 = vector.broadcast %56 : vector<16x1xf32> to vector<16x384xf32>
    %58 = arith.addf %55, %57 : vector<16x384xf32>
    %c0_32 = arith.constant 0 : index
    %c0_33 = arith.constant 0 : index
    %c0_34 = arith.constant 0 : index
    %59 = vector.load %arg4[%c0_32, %c0_33, %c0_34] : memref<1x16x384xf32, #tpu.memory_space<vmem>>, vector<1x16x384xf32>
    %60 = vector.shape_cast %59 : vector<1x16x384xf32> to vector<16x384xf32>
    %61 = vector.shape_cast %58 : vector<16x384xf32> to vector<1x16x384xf32>
    tpu.vector_store %arg4[%c0_32, %c0_33, %c0_34], %61 {strides = array<i32>} : memref<1x16x384xf32, #tpu.memory_space<vmem>>, vector<1x16x384xf32>,
    return
  }
  func.func @transform_0(%arg0: i32) -> (i32, i32, i32) {
    %c0_i32 = arith.constant 0 : i32
    %c0_i32_0 = arith.constant 0 : i32
    %c0_i32_1 = arith.constant 0 : i32
    return %arg0, %c0_i32, %c0_i32_0 : i32, i32, i32
  }
  func.func @transform_1(%arg0: i32) -> (i32, i32, i32) {
    %c0_i32 = arith.constant 0 : i32
    %c0_i32_0 = arith.constant 0 : i32
    %c0_i32_1 = arith.constant 0 : i32
    %c0_i32_2 = arith.constant 0 : i32
    return %c0_i32, %c0_i32_0, %c0_i32_1 : i32, i32, i32
  }
  func.func @transform_2(%arg0: i32) -> (i32, i32) {
    %c0_i32 = arith.constant 0 : i32
    %c0_i32_0 = arith.constant 0 : i32
    %c0_i32_1 = arith.constant 0 : i32
    return %c0_i32, %c0_i32_0 : i32, i32
  }
  func.func @transform_3(%arg0: i32) -> (i32, i32, i32) {
    %c0_i32 = arith.constant 0 : i32
    %c0_i32_0 = arith.constant 0 : i32
    %c0_i32_1 = arith.constant 0 : i32
    return %arg0, %c0_i32, %c0_i32_0 : i32, i32, i32
  }
}

</mosaic_0001>

<llo_original>
// kernel: neg.1
$region0: #{neg.1}
  #allocation0 [shape = 's32[1]{0}', space=sflag, size = 0x4, scoped, tag = 'scoped memory for neg.1']
  %s0 = inlined_call_operand.vmem [shape: f32[9,8,4], index: 0, kind: input, shape index: {}]
  %s1 = inlined_call_operand.vmem [shape: f32[9,8,4], index: 1, kind: output, shape index: {}]
  %v2 = vld [vmem:[%s0] sm:$0xff]
  %3 = xla_tuple %v2
  %4 = xla_tuple %3
  %v5 = vxor.u32 %v2, 2147483648
  %6 = xla_tuple %v5
  %7 = vst [vmem:[%s1] sm:$0xff] %v5
  %s8 = scalar_lea.vmem %s0, 8
  %v9 = vld [vmem:[%s8] sm:$0xff]
  %10 = xla_tuple %v9
  %11 = xla_tuple %10
  %v12 = vxor.u32 %v9, 2147483648
  %13 = xla_tuple %v12
  %s14 = scalar_lea.vmem %s1, 8
  %15 = vst [vmem:[%s14] sm:$0xff] %v12
  %s16 = scalar_lea.vmem %s0, 16
  %v17 = vld [vmem:[%s16] sm:$0xff]
  %18 = xla_tuple %v17
  %19 = xla_tuple %18
  %v20 = vxor.u32 %v17, 2147483648
  %21 = xla_tuple %v20
  %s22 = scalar_lea.vmem %s1, 16
  %23 = vst [vmem:[%s22] sm:$0xff] %v20
  %s24 = scalar_lea.vmem %s0, 24
  %v25 = vld [vmem:[%s24] sm:$0xff]
  %26 = xla_tuple %v25
  %27 = xla_tuple %26
  %v28 = vxor.u32 %v25, 2147483648
  %29 = xla_tuple %v28
  %s30 = scalar_lea.vmem %s1, 24
  %31 = vst [vmem:[%s30] sm:$0xff] %v28
  %s32 = scalar_lea.vmem %s0, 32
  %v33 = vld [vmem:[%s32] sm:$0xff]
  %34 = xla_tuple %v33
  %35 = xla_tuple %34
  %v36 = vxor.u32 %v33, 2147483648
  %37 = xla_tuple %v36
  %s38 = scalar_lea.vmem %s1, 32
  %39 = vst [vmem:[%s38] sm:$0xff] %v36
  %s40 = scalar_lea.vmem %s0, 40
  %v41 = vld [vmem:[%s40] sm:$0xff]
  %42 = xla_tuple %v41
  %43 = xla_tuple %42
  %v44 = vxor.u32 %v41, 2147483648
  %45 = xla_tuple %v44
  %s46 = scalar_lea.vmem %s1, 40
  %47 = vst [vmem:[%s46] sm:$0xff] %v44
  %s48 = scalar_lea.vmem %s0, 48
  %v49 = vld [vmem:[%s48] sm:$0xff]
  %50 = xla_tuple %v49
  %51 = xla_tuple %50
  %v52 = vxor.u32 %v49, 2147483648
  %53 = xla_tuple %v52
  %s54 = scalar_lea.vmem %s1, 48
  %55 = vst [vmem:[%s54] sm:$0xff] %v52
  %s56 = scalar_lea.vmem %s0, 56
  %v57 = vld [vmem:[%s56] sm:$0xff]
  %58 = xla_tuple %v57
  %59 = xla_tuple %58
  %v60 = vxor.u32 %v57, 2147483648
  %61 = xla_tuple %v60
  %s62 = scalar_lea.vmem %s1, 56
  %63 = vst [vmem:[%s62] sm:$0xff] %v60
  %s64 = scalar_lea.vmem %s0, 64
  %v65 = vld [vmem:[%s64] sm:$0xff]
  %66 = xla_tuple %v65
  %67 = xla_tuple %66
  %v68 = vxor.u32 %v65, 2147483648
  %69 = xla_tuple %v68
  %s70 = scalar_lea.vmem %s1, 64
  %71 = vst [vmem:[%s70] sm:$0xff] %v68

// kernel: custom-call.1
$region0: #{custom-call.1}
  %s0 = inlined_call_operand.hbm [shape: c64[2,4,16,16], index: 0, kind: input, shape index: {}]
  %s1 = inlined_call_operand.vmem [shape: f32[2,4,16,16], index: 1, kind: output, shape index: {}]
  %s2 = scalar_lea.hbm %s0, 2048
  $region1: #{custom-call.1} parent=0
    #allocation0 [shape = 's32[1]{0}', space=sflag, size = 0x4, scoped, tag = 'scoped memory for custom-call.1']
    %3 = vsyncpa [#allocation0], 0
    %s4 = sshll.u32 %s1, 4
    %s5 = int_to_ptr.vmem [resolvable:$true] %s4
    %7 = dma.hbm_to_vmem [thread:$0]  %s2, 2048, %s5, [#allocation0]
    %8 = dma.done [#allocation0], 2048
    %9 = vsyncpa [#allocation0], 1

// kernel: custom-call
$region0: #{custom-call}
  %s0 = inlined_call_operand.hbm [shape: c64[2,4,16,16], index: 0, kind: input, shape index: {}]
  %s1 = inlined_call_operand.vmem [shape: f32[2,4,16,16], index: 1, kind: output, shape index: {}]
  $region1: #{custom-call} parent=0
    #allocation0 [shape = 's32[1]{0}', space=sflag, size = 0x4, scoped, tag = 'scoped memory for custom-call']
    %2 = vsyncpa [#allocation0], 0
    %s3 = sshll.u32 %s1, 4
    %s4 = int_to_ptr.vmem [resolvable:$true] %s3
    %6 = dma.hbm_to_vmem [thread:$0]  %s0, 2048, %s4, [#allocation0]
    %7 = dma.done [#allocation0], 2048
    %8 = vsyncpa [#allocation0], 1

// kernel: custom-call.2
$region0: #{custom-call.2}
  %s0 = inlined_call_operand.vmem [shape: f32[2,8,16,16], index: 0, kind: input, shape index: {}]
  %s1 = inlined_call_operand.vmem [shape: f32[2,8,16,16], index: 1, kind: input, shape index: {}]
  %s2 = inlined_call_operand.hbm [shape: c64[2,8,16,16], index: 2, kind: output, shape index: {}]
  %s3 = scalar_lea.hbm %s2, 4096
  $region1: #{custom-call.2} parent=0
    #allocation0 [shape = 's32[1]{0}', space=sflag, size = 0x4, scoped, tag = 'scoped memory for custom-call.2']
    %4 = vsyncpa [#allocation0], 0
    %s5 = sshll.u32 %s0, 4
    %s6 = int_to_ptr.vmem [resolvable:$true] %s5
    %8 = dma.vmem_to_hbm [thread:$0]  %s6, 4096, %s2, [#allocation0]
    %9 = dma.done [#allocation0], 4096
    %10 = vsyncpa [#allocation0], 1
  $region2: #{custom-call.2} parent=0
    #allocation1 [shape = 's32[1]{0}', space=sflag, size = 0x4, scoped, tag = 'scoped memory for custom-call.2']
    %11 = vsyncpa [#allocation1], 0
    %s12 = sshll.u32 %s1, 4
    %s13 = int_to_ptr.vmem [resolvable:$true] %s12
    %15 = dma.vmem_to_hbm [thread:$0]  %s13, 4096, %s3, [#allocation1]
    %16 = dma.done [#allocation1], 4096
    %17 = vsyncpa [#allocation1], 1

// kernel: complex_conv2d_forward.1
$region0: #{complex_conv2d_forward.1}
  #allocation0 [shape = 'u32[]', space=smem, size = 0x4, offset = 0x4, fixed_abs, tag = 'smem constant byte address 0x4 - core index']
  #allocation1 [shape = 'u32[144,128]{1,0:T(1,128)}', space=vmem, size = 0x12000, scoped, tag = 'internal scratch']
  %s0 = inlined_call_operand.vmem [shape: f32[2,8,512], index: 0, kind: input, shape index: {}]
  %s1 = inlined_call_operand.vmem [shape: f32[9,16,8], index: 1, kind: input, shape index: {}]
  %s2 = inlined_call_operand.vmem [shape: f32[16,1], index: 2, kind: input, shape index: {}]
  %s3 = inlined_call_operand.vmem [shape: f32[2,16,384], index: 3, kind: output, shape index: {}]
  %s4 = sld [smem:[#allocation0]]
  $region45: #{complex_conv2d_forward.1} parent=0
    _
  %s6 = ssub.s32 1, %s4
  %s7 = scalar_select 0, %s6, %s4
  loop: start=0, step=1, limit=4
  $region2: #{complex_conv2d_forward.1} parent=0 // loop_pre_header
    _
  $region3: #{complex_conv2d_forward.1} parent=0 // loop_header
    %s9 = sphi 0, %s13
    %p10 = scmp.ge.s32.totalorder %s9, 4
    %s19 = sphi 0, %s21
    %s22 = sphi 0, %s19
    %s23 = sphi 0, %s22
    %s39 = sphi 0, %s23
    %s43 = sphi 0, %s43
    %s45 = sphi 0, %s43
    %s46 = sphi 0, %s45
    %s60 = sphi 0, %s46
    %s64 = sphi 0, %s64
    %s66 = sphi 0, %s64
    %s67 = sphi 0, %s66
    %s81 = sphi 0, %s67
    %s87 = sphi 0, %s89
    %s90 = sphi 0, %s87
    %s91 = sphi 0, %s90
    %s107 = sphi 0, %s91
  $region4: #{complex_conv2d_forward.1} parent=0 // loop_header_branch
    %12 = sbr.rel (%p10) target = $region8
  $region5: #{complex_conv2d_forward.1} parent=0 // loop_body
    %s14 = ssub.s32 %s9, 1
    %s15 = ssub.s32 %s9, 2
    %s16 = sadd.s32 %s9, 1
    %s17 = ssub.s32 %s9, %s16
    %p18 = scmp.eq.s32.totalorder %s17, 0
    %s20 = sadd.s32 %s19, 1
    %s21 = scalar_select %p18, %s19, %s20
    %p24 = pneg %p18
    %p25 = scmp.eq.s32.totalorder %s9, 1
    %p26 = por %p24, %p25
    %p27 = scmp.ne.s32.totalorder %s19, %s22
    %p28 = scmp.eq.s32.totalorder %s9, 0
    %p29 = por %p27, %p28
    %p30 = scmp.ne.s32.totalorder %s19, %s22
    %p31 = scmp.eq.s32.totalorder %s14, 1
    %p32 = por %p30, %p31
    %p33 = scmp.ne.s32.totalorder %s22, %s23
    %p34 = scmp.eq.s32.totalorder %s14, 0
    %p35 = por %p33, %p34
    %p36 = scmp.ne.s32.totalorder %s22, %s23
    %p37 = scmp.eq.s32.totalorder %s15, 1
    %p38 = por %p36, %p37
    %p40 = scmp.ne.s32.totalorder %s23, %s39
    %p41 = scmp.eq.s32.totalorder %s15, 0
    %p42 = por %p40, %p41
    %s44 = sadd.s32 %s43, 1
    %p47 = scmp.eq.s32.totalorder %s9, 1
    %p48 = scmp.ne.s32.totalorder %s43, %s45
    %p49 = scmp.eq.s32.totalorder %s9, 0
    %p50 = por %p48, %p49
    %p51 = scmp.ne.s32.totalorder %s43, %s45
    %p52 = scmp.eq.s32.totalorder %s14, 1
    %p53 = por %p51, %p52
    %p54 = scmp.ne.s32.totalorder %s45, %s46
    %p55 = scmp.eq.s32.totalorder %s14, 0
    %p56 = por %p54, %p55
    %p57 = scmp.ne.s32.totalorder %s45, %s46
    %p58 = scmp.eq.s32.totalorder %s15, 1
    %p59 = por %p57, %p58
    %p61 = scmp.ne.s32.totalorder %s46, %s60
    %p62 = scmp.eq.s32.totalorder %s15, 0
    %p63 = por %p61, %p62
    %s65 = sadd.s32 %s64, 1
    %p68 = scmp.eq.s32.totalorder %s9, 1
    %p69 = scmp.ne.s32.totalorder %s64, %s66
    %p70 = scmp.eq.s32.totalorder %s9, 0
    %p71 = por %p69, %p70
    %p72 = scmp.ne.s32.totalorder %s64, %s66
    %p73 = scmp.eq.s32.totalorder %s14, 1
    %p74 = por %p72, %p73
    %p75 = scmp.ne.s32.totalorder %s66, %s67
    %p76 = scmp.eq.s32.totalorder %s14, 0
    %p77 = por %p75, %p76
    %p78 = scmp.ne.s32.totalorder %s66, %s67
    %p79 = scmp.eq.s32.totalorder %s15, 1
    %p80 = por %p78, %p79
    %p82 = scmp.ne.s32.totalorder %s67, %s81
    %p83 = scmp.eq.s32.totalorder %s15, 0
    %p84 = por %p82, %p83
    %s85 = ssub.s32 %s9, %s16
    %p86 = scmp.eq.s32.totalorder %s85, 0
    %s88 = sadd.s32 %s87, 1
    %s89 = scalar_select %p86, %s87, %s88
    %p92 = pneg %p86
    %p93 = scmp.eq.s32.totalorder %s9, 1
    %p94 = por %p92, %p93
    %p95 = scmp.ne.s32.totalorder %s87, %s90
    %p96 = scmp.eq.s32.totalorder %s9, 0
    %p97 = por %p95, %p96
    %p98 = scmp.ne.s32.totalorder %s87, %s90
    %p99 = scmp.eq.s32.totalorder %s14, 1
    %p100 = por %p98, %p99
    %p101 = scmp.ne.s32.totalorder %s90, %s91
    %p102 = scmp.eq.s32.totalorder %s14, 0
    %p103 = por %p101, %p102
    %p104 = scmp.ne.s32.totalorder %s90, %s91
    %p105 = scmp.eq.s32.totalorder %s15, 1
    %p106 = por %p104, %p105
    %p108 = scmp.ne.s32.totalorder %s91, %s107
    %p109 = scmp.eq.s32.totalorder %s15, 0
    %p110 = por %p108, %p109
    %p111 = scmp.le.s32.totalorder 1, %s9
    %p112 = scmp.lt.s32.totalorder %s9, 3
    %p113 = pnand %p111, %p112
    %p114 = pneg %p113
    // Predicated region
    $region9: #{complex_conv2d_forward.1} parent=5 // pred_check
      _
    $region10: #{complex_conv2d_forward.1} parent=5 // pred_check_branch
      %116 = sbr.rel (%p113) target = $region12
    $region11: #{complex_conv2d_forward.1} parent=5 // pred_region
      %s117 = ssub.s32 %s9, 1
      // Predicated region
      $region13: #{complex_conv2d_forward.1} parent=11 // pred_check
        %p118 = pneg %p56
      $region14: #{complex_conv2d_forward.1} parent=11 // pred_check_branch
        %120 = sbr.rel (%p118) target = $region16
      $region15: #{complex_conv2d_forward.1} parent=11 // pred_region
        _
      $region16: #{complex_conv2d_forward.1} parent=11 // pred_fallthru
        _
      // Predicated region
      $region17: #{complex_conv2d_forward.1} parent=11 // pred_check
        %p121 = pneg %p77
      $region18: #{complex_conv2d_forward.1} parent=11 // pred_check_branch
        %123 = sbr.rel (%p121) target = $region20
      $region19: #{complex_conv2d_forward.1} parent=11 // pred_region
        _
      $region20: #{complex_conv2d_forward.1} parent=11 // pred_fallthru
        _
    $region12: #{complex_conv2d_forward.1} parent=5 // pred_fallthru
      _
    %p124 = scmp.lt.s32.totalorder %s9, 2
    // Predicated region
    $region21: #{complex_conv2d_forward.1} parent=5 // pred_check
      %p125 = pneg %p124
    $region22: #{complex_conv2d_forward.1} parent=5 // pred_check_branch
      %127 = sbr.rel (%p125) target = $region24
    $region23: #{complex_conv2d_forward.1} parent=5 // pred_region
      // Predicated region
      $region25: #{complex_conv2d_forward.1} parent=23 // pred_check
        %p128 = pneg %p29
      $region26: #{complex_conv2d_forward.1} parent=23 // pred_check_branch
        %130 = sbr.rel (%p128) target = $region28
      $region27: #{complex_conv2d_forward.1} parent=23 // pred_region
        %p131 = scmp.lt.s32.totalorder %s9, 1
        %s132 = scalar_select %p131, %s9, 1
        %s133 = smul.addr %s132, 4
        %s134 = smul.addr %s133, 8
        %s135 = scalar_lea.vmem %s0, %s134
      $region28: #{complex_conv2d_forward.1} parent=23 // pred_fallthru
        _
    $region24: #{complex_conv2d_forward.1} parent=5 // pred_fallthru
      _
    %p136 = scmp.le.s32.totalorder 1, %s9
    %p137 = scmp.lt.s32.totalorder %s9, 3
    %p138 = pnand %p136, %p137
    %p139 = pneg %p138
    // Predicated region
    $region29: #{complex_conv2d_forward.1} parent=5 // pred_check
      _
    $region30: #{complex_conv2d_forward.1} parent=5 // pred_check_branch
      %141 = sbr.rel (%p138) target = $region32
    $region31: #{complex_conv2d_forward.1} parent=5 // pred_region
      %s142 = ssub.s32 %s9, 1
      %p143 = scmp.lt.s32.totalorder %s14, 1
      %s144 = scalar_select %p143, %s14, 1
      %s145 = smul.addr %s144, 4
      %s146 = smul.addr %s145, 8
      %s147 = scalar_lea.vmem %s0, %s146
      %p148 = pneg %p35
      %p149 = pneg %p32
      %p150 = pneg %p56
      %p151 = pneg %p53
      %p152 = pneg %p77
      %p153 = pneg %p74
      %p154 = pneg %p103
      %p155 = pneg %p100
      %p156 = scmp.lt.s32.totalorder %s14, 1
      %s157 = scalar_select %p156, %s14, 1
      %s158 = smul.addr %s157, 6
      %s159 = smul.addr %s158, 8
      %s160 = scalar_lea.vmem %s3, %s159
      %p161 = scmp.lt.s32.totalorder %s14, 1
      %s162 = scalar_select %p161, %s14, 1
      %s163 = smul.addr %s162, 4
      %s164 = smul.addr %s163, 8
      %s165 = scalar_lea.vmem %s0, %s164
      %p166 = scmp.lt.s32.totalorder %s14, 1
      %s167 = scalar_select %p166, %s14, 1
      %s168 = smul.addr %s167, 6
      %s169 = smul.addr %s168, 8
      %s170 = scalar_lea.vmem %s3, %s169
      %v171 = vld [vmem:[%s165] sm:$0xff]
      %v172 = vld [vmem:[%s165 + $0x8] sm:$0xff]
      %v173 = vld [vmem:[%s165 + $0x10] sm:$0xff]
      %v174 = vld [vmem:[%s165 + $0x18] sm:$0xff]
      %v175 = vld [vmem:[%s1] sm:$0xff]
      %v176 = vld [vmem:[%s1 + $0x8] sm:$0xff]
      %177 = vrot.lane.b32.xlu0 %v171, 127
      %v178 = vpop.permute.xlu0 %177
      %179 = vrot.lane.b32.xlu0 %v172, 127
      %v180 = vpop.permute.xlu0 %179
      %181 = vrot.lane.b32.xlu0 %v173, 127
      %v182 = vpop.permute.xlu0 %181
      %183 = vrot.lane.b32.xlu0 %v174, 127
      %v184 = vpop.permute.xlu0 %183
      %v185 = vlaneseq
      %v186 = vand.u32 %v185, 127
      %vm187 = vcmp.lt.s32.totalorder %v186, 127
      %v188 = vsel %vm187, %v182, %v184
      %v189 = vsel %vm187, %v180, %v182
      %v190 = vsel %vm187, %v178, %v180
      %s191 = scalar_lea.vmem %s1, 16
      %v192 = vld [vmem:[%s191] sm:$0xff]
      %v193 = vld [vmem:[%s191 + $0x8] sm:$0xff]
      %vm194 = vcmask 64512
      %v196 = vsel %vm194, %v192, 0
      %v199 = vsel %vm194, %v193, 0
      %201 = vmatprep.subr.mxu0 0.0
      %202 = vmatpush1.msra.mxu0 0.0
      %203 = vmatprep.subr.mxu0 0.0
      %204 = vmatpush1.msra.mxu0 0.0
      %205 = vmatprep.subr.mxu0 0.0
      %206 = vmatpush1.msra.mxu0 0.0
      %207 = vmatprep.subr.mxu0 0.0
      %208 = vmatpush1.msra.mxu0 0.0
      %209 = vmatprep.subr.mxu0 0.0
      %210 = vmatpush1.msra.mxu0 0.0
      %211 = vmatprep.subr.mxu0 0.0
      %212 = vmatpush1.msra.mxu0 0.0
      %213 = vmatprep.subr.mxu0 0.0
      %214 = vmatpush1.msra.mxu0 0.0
      %215 = vmatprep.subr.mxu0 0.0
      %216 = vmatpush1.msra.mxu0 0.0
      %217 = vmatprep.subr.mxu0 0.0
      %218 = vmatpush1.msra.mxu0 0.0
      %219 = vmatprep.subr.mxu0 0.0
      %220 = vmatpush1.msra.mxu0 0.0
      %221 = vmatprep.subr.mxu0 0.0
      %222 = vmatpush1.msra.mxu0 0.0
      %223 = vmatprep.subr.mxu0 0.0
      %224 = vmatpush1.msra.mxu0 0.0
      %225 = vmatprep.subr.mxu0 0.0
      %226 = vmatpush1.msra.mxu0 0.0
      %227 = vmatprep.subr.mxu0 0.0
      %228 = vmatpush1.msra.mxu0 0.0
      %229 = vmatprep.subr.mxu0 0.0
      %230 = vmatpush1.msra.mxu0 0.0
      %231 = vmatprep.subr.mxu0 %v189
      %232 = vmatpush1.msra.mxu0 %v190
      %233 = vmatprep.subr.mxu0 0.0
      %234 = vmatpush2.msra.mxu0 0.0
      %235 = vmatprep.subr.mxu0 0.0
      %236 = vmatpush2.msra.mxu0 0.0
      %237 = vmatprep.subr.mxu0 0.0
      %238 = vmatpush2.msra.mxu0 0.0
      %239 = vmatprep.subr.mxu0 0.0
      %240 = vmatpush2.msra.mxu0 0.0
      %241 = vmatprep.subr.mxu0 0.0
      %242 = vmatpush2.msra.mxu0 0.0
      %243 = vmatprep.subr.mxu0 0.0
      %244 = vmatpush2.msra.mxu0 0.0
      %245 = vmatprep.subr.mxu0 0.0
      %246 = vmatpush2.msra.mxu0 0.0
      %247 = vmatprep.subr.mxu0 0.0
      %248 = vmatpush2.msra.mxu0 0.0
      %249 = vmatprep.subr.mxu0 0.0
      %250 = vmatpush2.msra.mxu0 0.0
      %251 = vmatprep.subr.mxu0 0.0
      %252 = vmatpush2.msra.mxu0 0.0
      %253 = vmatprep.subr.mxu0 0.0
      %254 = vmatpush2.msra.mxu0 0.0
      %255 = vmatprep.subr.mxu0 0.0
      %256 = vmatpush2.msra.mxu0 0.0
      %257 = vmatprep.subr.mxu0 0.0
      %258 = vmatpush2.msra.mxu0 0.0
      %259 = vmatprep.subr.mxu0 0.0
      %260 = vmatpush2.msra.mxu0 0.0
      %261 = vmatprep.subr.mxu0 0.0
      %262 = vmatpush2.msra.mxu0 0.0
      %263 = vmatprep.subr.mxu0 0.0
      %264 = vmatpush2.msra.mxu0 0.0
      %265 = vmatprep.mubr.f32.mxu0 0.0
      %266 = vmatmul.mubr.f32.gmra.mxu0 %v196
      %v267 = vpop.f32.mrf.mxu0
      %v268 = vadd.f32 0.0, %v267
      %v269 = vpop.f32.mrf.mxu0
      %v270 = vadd.f32 0.0, %v269
      %271 = vmatprep.mubr.f32.mxu0 0.0
      %272 = vmatmul.mubr.f32.gmra.mxu0 %v199
      %v273 = vpop.f32.mrf.mxu0
      %v274 = vadd.f32 0.0, %v273
      %v275 = vpop.f32.mrf.mxu0
      %v276 = vadd.f32 0.0, %v275
      %277 = vdwg.mxu0
      %278 = vmatprep.subr.mxu0 0.0
      %279 = vmatpush1.msra.mxu0 0.0
      %280 = vmatprep.subr.mxu0 0.0
      %281 = vmatpush1.msra.mxu0 0.0
      %282 = vmatprep.subr.mxu0 0.0
      %283 = vmatpush1.msra.mxu0 0.0
      %284 = vmatprep.subr.mxu0 0.0
      %285 = vmatpush1.msra.mxu0 0.0
      %286 = vmatprep.subr.mxu0 0.0
      %287 = vmatpush1.msra.mxu0 0.0
      %288 = vmatprep.subr.mxu0 0.0
      %289 = vmatpush1.msra.mxu0 0.0
      %290 = vmatprep.subr.mxu0 0.0
      %291 = vmatpush1.msra.mxu0 0.0
      %292 = vmatprep.subr.mxu0 0.0
      %293 = vmatpush1.msra.mxu0 0.0
      %294 = vmatprep.subr.mxu0 0.0
      %295 = vmatpush1.msra.mxu0 0.0
      %296 = vmatprep.subr.mxu0 0.0
      %297 = vmatpush1.msra.mxu0 0.0
      %298 = vmatprep.subr.mxu0 0.0
      %299 = vmatpush1.msra.mxu0 0.0
      %300 = vmatprep.subr.mxu0 0.0
      %301 = vmatpush1.msra.mxu0 0.0
      %302 = vmatprep.subr.mxu0 0.0
      %303 = vmatpush1.msra.mxu0 0.0
      %304 = vmatprep.subr.mxu0 0.0
      %305 = vmatpush1.msra.mxu0 0.0
      %306 = vmatprep.subr.mxu0 0.0
      %307 = vmatpush1.msra.mxu0 0.0
      %308 = vmatprep.subr.mxu0 0.0
      %309 = vmatpush1.msra.mxu0 %v188
      %310 = vmatprep.subr.mxu0 0.0
      %311 = vmatpush2.msra.mxu0 0.0
      %312 = vmatprep.subr.mxu0 0.0
      %313 = vmatpush2.msra.mxu0 0.0
      %314 = vmatprep.subr.mxu0 0.0
      %315 = vmatpush2.msra.mxu0 0.0
      %316 = vmatprep.subr.mxu0 0.0
      %317 = vmatpush2.msra.mxu0 0.0
      %318 = vmatprep.subr.mxu0 0.0
      %319 = vmatpush2.msra.mxu0 0.0
      %320 = vmatprep.subr.mxu0 0.0
      %321 = vmatpush2.msra.mxu0 0.0
      %322 = vmatprep.subr.mxu0 0.0
      %323 = vmatpush2.msra.mxu0 0.0
      %324 = vmatprep.subr.mxu0 0.0
      %325 = vmatpush2.msra.mxu0 0.0
      %326 = vmatprep.subr.mxu0 0.0
      %327 = vmatpush2.msra.mxu0 0.0
      %328 = vmatprep.subr.mxu0 0.0
      %329 = vmatpush2.msra.mxu0 0.0
      %330 = vmatprep.subr.mxu0 0.0
      %331 = vmatpush2.msra.mxu0 0.0
      %332 = vmatprep.subr.mxu0 0.0
      %333 = vmatpush2.msra.mxu0 0.0
      %334 = vmatprep.subr.mxu0 0.0
      %335 = vmatpush2.msra.mxu0 0.0
      %336 = vmatprep.subr.mxu0 0.0
      %337 = vmatpush2.msra.mxu0 0.0
      %338 = vmatprep.subr.mxu0 0.0
      %339 = vmatpush2.msra.mxu0 0.0
      %340 = vmatprep.subr.mxu0 0.0
      %341 = vmatpush2.msra.mxu0 0.0
      %342 = vmatprep.mubr.f32.mxu0 0.0
      %343 = vmatmul.mubr.f32.gmra.mxu0 %v196
      %v344 = vpop.f32.mrf.mxu0
      %v345 = vadd.f32 0.0, %v344
      %v346 = vpop.f32.mrf.mxu0
      %347 = vmatprep.mubr.f32.mxu0 0.0
      %348 = vmatmul.mubr.f32.gmra.mxu0 %v199
      %v349 = vpop.f32.mrf.mxu0
      %v350 = vadd.f32 0.0, %v349
      %v351 = vpop.f32.mrf.mxu0
      %352 = vdwg.mxu0
      %v354 = vsel %vm194, %v175, 0
      %v357 = vsel %vm194, %v176, 0
      %359 = vmatprep.subr.mxu0 0.0
      %360 = vmatpush1.msra.mxu0 0.0
      %361 = vmatprep.subr.mxu0 0.0
      %362 = vmatpush1.msra.mxu0 0.0
      %363 = vmatprep.subr.mxu0 0.0
      %364 = vmatpush1.msra.mxu0 0.0
      %365 = vmatprep.subr.mxu0 0.0
      %366 = vmatpush1.msra.mxu0 0.0
      %367 = vmatprep.subr.mxu0 0.0
      %368 = vmatpush1.msra.mxu0 0.0
      %369 = vmatprep.subr.mxu0 0.0
      %370 = vmatpush1.msra.mxu0 0.0
      %371 = vmatprep.subr.mxu0 0.0
      %372 = vmatpush1.msra.mxu0 0.0
      %373 = vmatprep.subr.mxu0 0.0
      %374 = vmatpush1.msra.mxu0 0.0
      %375 = vmatprep.subr.mxu0 0.0
      %376 = vmatpush1.msra.mxu0 0.0
      %377 = vmatprep.subr.mxu0 0.0
      %378 = vmatpush1.msra.mxu0 0.0
      %379 = vmatprep.subr.mxu0 0.0
      %380 = vmatpush1.msra.mxu0 0.0
      %381 = vmatprep.subr.mxu0 0.0
      %382 = vmatpush1.msra.mxu0 0.0
      %383 = vmatprep.subr.mxu0 0.0
      %384 = vmatpush1.msra.mxu0 0.0
      %385 = vmatprep.subr.mxu0 0.0
      %386 = vmatpush1.msra.mxu0 0.0
      %387 = vmatprep.subr.mxu0 0.0
      %388 = vmatpush1.msra.mxu0 0.0
      %389 = vmatprep.subr.mxu0 %v172
      %390 = vmatpush1.msra.mxu0 %v171
      %391 = vmatprep.subr.mxu0 0.0
      %392 = vmatpush2.msra.mxu0 0.0
      %393 = vmatprep.subr.mxu0 0.0
      %394 = vmatpush2.msra.mxu0 0.0
      %395 = vmatprep.subr.mxu0 0.0
      %396 = vmatpush2.msra.mxu0 0.0
      %397 = vmatprep.subr.mxu0 0.0
      %398 = vmatpush2.msra.mxu0 0.0
      %399 = vmatprep.subr.mxu0 0.0
      %400 = vmatpush2.msra.mxu0 0.0
      %401 = vmatprep.subr.mxu0 0.0
      %402 = vmatpush2.msra.mxu0 0.0
      %403 = vmatprep.subr.mxu0 0.0
      %404 = vmatpush2.msra.mxu0 0.0
      %405 = vmatprep.subr.mxu0 0.0
      %406 = vmatpush2.msra.mxu0 0.0
      %407 = vmatprep.subr.mxu0 0.0
      %408 = vmatpush2.msra.mxu0 0.0
      %409 = vmatprep.subr.mxu0 0.0
      %410 = vmatpush2.msra.mxu0 0.0
      %411 = vmatprep.subr.mxu0 0.0
      %412 = vmatpush2.msra.mxu0 0.0
      %413 = vmatprep.subr.mxu0 0.0
      %414 = vmatpush2.msra.mxu0 0.0
      %415 = vmatprep.subr.mxu0 0.0
      %416 = vmatpush2.msra.mxu0 0.0
      %417 = vmatprep.subr.mxu0 0.0
      %418 = vmatpush2.msra.mxu0 0.0
      %419 = vmatprep.subr.mxu0 0.0
      %420 = vmatpush2.msra.mxu0 0.0
      %421 = vmatprep.subr.mxu0 0.0
      %422 = vmatpush2.msra.mxu0 0.0
      %423 = vmatprep.mubr.f32.mxu0 0.0
      %424 = vmatmul.mubr.f32.gmra.mxu0 %v354
      %v425 = vpop.f32.mrf.mxu0
      %v426 = vadd.f32 %v268, %v425
      %v427 = vpop.f32.mrf.mxu0
      %v428 = vadd.f32 %v270, %v427
      %429 = vmatprep.mubr.f32.mxu0 0.0
      %430 = vmatmul.mubr.f32.gmra.mxu0 %v357
      %v431 = vpop.f32.mrf.mxu0
      %v432 = vadd.f32 %v274, %v431
      %v433 = vpop.f32.mrf.mxu0
      %v434 = vadd.f32 %v276, %v433
      %435 = vdwg.mxu0
      %436 = vmatprep.subr.mxu0 0.0
      %437 = vmatpush1.msra.mxu0 0.0
      %438 = vmatprep.subr.mxu0 0.0
      %439 = vmatpush1.msra.mxu0 0.0
      %440 = vmatprep.subr.mxu0 0.0
      %441 = vmatpush1.msra.mxu0 0.0
      %442 = vmatprep.subr.mxu0 0.0
      %443 = vmatpush1.msra.mxu0 0.0
      %444 = vmatprep.subr.mxu0 0.0
      %445 = vmatpush1.msra.mxu0 0.0
      %446 = vmatprep.subr.mxu0 0.0
      %447 = vmatpush1.msra.mxu0 0.0
      %448 = vmatprep.subr.mxu0 0.0
      %449 = vmatpush1.msra.mxu0 0.0
      %450 = vmatprep.subr.mxu0 0.0
      %451 = vmatpush1.msra.mxu0 0.0
      %452 = vmatprep.subr.mxu0 0.0
      %453 = vmatpush1.msra.mxu0 0.0
      %454 = vmatprep.subr.mxu0 0.0
      %455 = vmatpush1.msra.mxu0 0.0
      %456 = vmatprep.subr.mxu0 0.0
      %457 = vmatpush1.msra.mxu0 0.0
      %458 = vmatprep.subr.mxu0 0.0
      %459 = vmatpush1.msra.mxu0 0.0
      %460 = vmatprep.subr.mxu0 0.0
      %461 = vmatpush1.msra.mxu0 0.0
      %462 = vmatprep.subr.mxu0 0.0
      %463 = vmatpush1.msra.mxu0 0.0
      %464 = vmatprep.subr.mxu0 0.0
      %465 = vmatpush1.msra.mxu0 0.0
      %466 = vmatprep.subr.mxu0 0.0
      %467 = vmatpush1.msra.mxu0 %v173
      %468 = vmatprep.subr.mxu0 0.0
      %469 = vmatpush2.msra.mxu0 0.0
      %470 = vmatprep.subr.mxu0 0.0
      %471 = vmatpush2.msra.mxu0 0.0
      %472 = vmatprep.subr.mxu0 0.0
      %473 = vmatpush2.msra.mxu0 0.0
      %474 = vmatprep.subr.mxu0 0.0
      %475 = vmatpush2.msra.mxu0 0.0
      %476 = vmatprep.subr.mxu0 0.0
      %477 = vmatpush2.msra.mxu0 0.0
      %478 = vmatprep.subr.mxu0 0.0
      %479 = vmatpush2.msra.mxu0 0.0
      %480 = vmatprep.subr.mxu0 0.0
      %481 = vmatpush2.msra.mxu0 0.0
      %482 = vmatprep.subr.mxu0 0.0
      %483 = vmatpush2.msra.mxu0 0.0
      %484 = vmatprep.subr.mxu0 0.0
      %485 = vmatpush2.msra.mxu0 0.0
      %486 = vmatprep.subr.mxu0 0.0
      %487 = vmatpush2.msra.mxu0 0.0
      %488 = vmatprep.subr.mxu0 0.0
      %489 = vmatpush2.msra.mxu0 0.0
      %490 = vmatprep.subr.mxu0 0.0
      %491 = vmatpush2.msra.mxu0 0.0
      %492 = vmatprep.subr.mxu0 0.0
      %493 = vmatpush2.msra.mxu0 0.0
      %494 = vmatprep.subr.mxu0 0.0
      %495 = vmatpush2.msra.mxu0 0.0
      %496 = vmatprep.subr.mxu0 0.0
      %497 = vmatpush2.msra.mxu0 0.0
      %498 = vmatprep.subr.mxu0 0.0
      %499 = vmatpush2.msra.mxu0 0.0
      %500 = vmatprep.mubr.f32.mxu0 0.0
      %501 = vmatmul.mubr.f32.gmra.mxu0 %v354
      %v502 = vpop.f32.mrf.mxu0
      %v503 = vadd.f32 %v345, %v502
      %v504 = vpop.f32.mrf.mxu0
      %505 = vmatprep.mubr.f32.mxu0 0.0
      %506 = vmatmul.mubr.f32.gmra.mxu0 %v357
      %v507 = vpop.f32.mrf.mxu0
      %v508 = vadd.f32 %v350, %v507
      %v509 = vpop.f32.mrf.mxu0
      %510 = vdwg.mxu0
      %511 = vrot.lane.b32.xlu0 %v171, 126
      %v512 = vpop.permute.xlu0 %511
      %513 = vrot.lane.b32.xlu0 %v172, 126
      %v514 = vpop.permute.xlu0 %513
      %515 = vrot.lane.b32.xlu0 %v173, 126
      %v516 = vpop.permute.xlu0 %515
      %517 = vrot.lane.b32.xlu0 %v174, 126
      %v518 = vpop.permute.xlu0 %517
      %vm519 = vcmp.lt.s32.totalorder %v186, 126
      %v520 = vsel %vm519, %v516, %v518
      %v521 = vsel %vm519, %v514, %v516
      %v522 = vsel %vm519, %v512, %v514
      %s523 = scalar_lea.vmem %s1, 32
      %v524 = vld [vmem:[%s523] sm:$0xff]
      %v525 = vld [vmem:[%s523 + $0x8] sm:$0xff]
      %v527 = vsel %vm194, %v524, 0
      %v530 = vsel %vm194, %v525, 0
      %532 = vmatprep.subr.mxu0 0.0
      %533 = vmatpush1.msra.mxu0 0.0
      %534 = vmatprep.subr.mxu0 0.0
      %535 = vmatpush1.msra.mxu0 0.0
      %536 = vmatprep.subr.mxu0 0.0
      %537 = vmatpush1.msra.mxu0 0.0
      %538 = vmatprep.subr.mxu0 0.0
      %539 = vmatpush1.msra.mxu0 0.0
      %540 = vmatprep.subr.mxu0 0.0
      %541 = vmatpush1.msra.mxu0 0.0
      %542 = vmatprep.subr.mxu0 0.0
      %543 = vmatpush1.msra.mxu0 0.0
      %544 = vmatprep.subr.mxu0 0.0
      %545 = vmatpush1.msra.mxu0 0.0
      %546 = vmatprep.subr.mxu0 0.0
      %547 = vmatpush1.msra.mxu0 0.0
      %548 = vmatprep.subr.mxu0 0.0
      %549 = vmatpush1.msra.mxu0 0.0
      %550 = vmatprep.subr.mxu0 0.0
      %551 = vmatpush1.msra.mxu0 0.0
      %552 = vmatprep.subr.mxu0 0.0
      %553 = vmatpush1.msra.mxu0 0.0
      %554 = vmatprep.subr.mxu0 0.0
      %555 = vmatpush1.msra.mxu0 0.0
      %556 = vmatprep.subr.mxu0 0.0
      %557 = vmatpush1.msra.mxu0 0.0
      %558 = vmatprep.subr.mxu0 0.0
      %559 = vmatpush1.msra.mxu0 0.0
      %560 = vmatprep.subr.mxu0 0.0
      %561 = vmatpush1.msra.mxu0 0.0
      %562 = vmatprep.subr.mxu0 %v521
      %563 = vmatpush1.msra.mxu0 %v522
      %564 = vmatprep.subr.mxu0 0.0
      %565 = vmatpush2.msra.mxu0 0.0
      %566 = vmatprep.subr.mxu0 0.0
      %567 = vmatpush2.msra.mxu0 0.0
      %568 = vmatprep.subr.mxu0 0.0
      %569 = vmatpush2.msra.mxu0 0.0
      %570 = vmatprep.subr.mxu0 0.0
      %571 = vmatpush2.msra.mxu0 0.0
      %572 = vmatprep.subr.mxu0 0.0
      %573 = vmatpush2.msra.mxu0 0.0
      %574 = vmatprep.subr.mxu0 0.0
      %575 = vmatpush2.msra.mxu0 0.0
      %576 = vmatprep.subr.mxu0 0.0
      %577 = vmatpush2.msra.mxu0 0.0
      %578 = vmatprep.subr.mxu0 0.0
      %579 = vmatpush2.msra.mxu0 0.0
      %580 = vmatprep.subr.mxu0 0.0
      %581 = vmatpush2.msra.mxu0 0.0
      %582 = vmatprep.subr.mxu0 0.0
      %583 = vmatpush2.msra.mxu0 0.0
      %584 = vmatprep.subr.mxu0 0.0
      %585 = vmatpush2.msra.mxu0 0.0
      %586 = vmatprep.subr.mxu0 0.0
      %587 = vmatpush2.msra.mxu0 0.0
      %588 = vmatprep.subr.mxu0 0.0
      %589 = vmatpush2.msra.mxu0 0.0
      %590 = vmatprep.subr.mxu0 0.0
      %591 = vmatpush2.msra.mxu0 0.0
      %592 = vmatprep.subr.mxu0 0.0
      %593 = vmatpush2.msra.mxu0 0.0
      %594 = vmatprep.subr.mxu0 0.0
      %595 = vmatpush2.msra.mxu0 0.0
      %596 = vmatprep.mubr.f32.mxu0 0.0
      %597 = vmatmul.mubr.f32.gmra.mxu0 %v527
      %v598 = vpop.f32.mrf.mxu0
      %v599 = vadd.f32 0.0, %v598
      %v600 = vpop.f32.mrf.mxu0
      %v601 = vadd.f32 0.0, %v600
      %602 = vmatprep.mubr.f32.mxu0 0.0
      %603 = vmatmul.mubr.f32.gmra.mxu0 %v530
      %v604 = vpop.f32.mrf.mxu0
      %v605 = vadd.f32 0.0, %v604
      %v606 = vpop.f32.mrf.mxu0
      %v607 = vadd.f32 0.0, %v606
      %608 = vdwg.mxu0
      %609 = vmatprep.subr.mxu0 0.0
      %610 = vmatpush1.msra.mxu0 0.0
      %611 = vmatprep.subr.mxu0 0.0
      %612 = vmatpush1.msra.mxu0 0.0
      %613 = vmatprep.subr.mxu0 0.0
      %614 = vmatpush1.msra.mxu0 0.0
      %615 = vmatprep.subr.mxu0 0.0
      %616 = vmatpush1.msra.mxu0 0.0
      %617 = vmatprep.subr.mxu0 0.0
      %618 = vmatpush1.msra.mxu0 0.0
      %619 = vmatprep.subr.mxu0 0.0
      %620 = vmatpush1.msra.mxu0 0.0
      %621 = vmatprep.subr.mxu0 0.0
      %622 = vmatpush1.msra.mxu0 0.0
      %623 = vmatprep.subr.mxu0 0.0
      %624 = vmatpush1.msra.mxu0 0.0
      %625 = vmatprep.subr.mxu0 0.0
      %626 = vmatpush1.msra.mxu0 0.0
      %627 = vmatprep.subr.mxu0 0.0
      %628 = vmatpush1.msra.mxu0 0.0
      %629 = vmatprep.subr.mxu0 0.0
      %630 = vmatpush1.msra.mxu0 0.0
      %631 = vmatprep.subr.mxu0 0.0
      %632 = vmatpush1.msra.mxu0 0.0
      %633 = vmatprep.subr.mxu0 0.0
      %634 = vmatpush1.msra.mxu0 0.0
      %635 = vmatprep.subr.mxu0 0.0
      %636 = vmatpush1.msra.mxu0 0.0
      %637 = vmatprep.subr.mxu0 0.0
      %638 = vmatpush1.msra.mxu0 0.0
      %639 = vmatprep.subr.mxu0 0.0
      %640 = vmatpush1.msra.mxu0 %v520
      %641 = vmatprep.subr.mxu0 0.0
      %642 = vmatpush2.msra.mxu0 0.0
      %643 = vmatprep.subr.mxu0 0.0
      %644 = vmatpush2.msra.mxu0 0.0
      %645 = vmatprep.subr.mxu0 0.0
      %646 = vmatpush2.msra.mxu0 0.0
      %647 = vmatprep.subr.mxu0 0.0
      %648 = vmatpush2.msra.mxu0 0.0
      %649 = vmatprep.subr.mxu0 0.0
      %650 = vmatpush2.msra.mxu0 0.0
      %651 = vmatprep.subr.mxu0 0.0
      %652 = vmatpush2.msra.mxu0 0.0
      %653 = vmatprep.subr.mxu0 0.0
      %654 = vmatpush2.msra.mxu0 0.0
      %655 = vmatprep.subr.mxu0 0.0
      %656 = vmatpush2.msra.mxu0 0.0
      %657 = vmatprep.subr.mxu0 0.0
      %658 = vmatpush2.msra.mxu0 0.0
      %659 = vmatprep.subr.mxu0 0.0
      %660 = vmatpush2.msra.mxu0 0.0
      %661 = vmatprep.subr.mxu0 0.0
      %662 = vmatpush2.msra.mxu0 0.0
      %663 = vmatprep.subr.mxu0 0.0
      %664 = vmatpush2.msra.mxu0 0.0
      %665 = vmatprep.subr.mxu0 0.0
      %666 = vmatpush2.msra.mxu0 0.0
      %667 = vmatprep.subr.mxu0 0.0
      %668 = vmatpush2.msra.mxu0 0.0
      %669 = vmatprep.subr.mxu0 0.0
      %670 = vmatpush2.msra.mxu0 0.0
      %671 = vmatprep.subr.mxu0 0.0
      %672 = vmatpush2.msra.mxu0 0.0
      %673 = vmatprep.mubr.f32.mxu0 0.0
      %674 = vmatmul.mubr.f32.gmra.mxu0 %v527
      %v675 = vpop.f32.mrf.mxu0
      %v676 = vadd.f32 0.0, %v675
      %v677 = vpop.f32.mrf.mxu0
      %678 = vmatprep.mubr.f32.mxu0 0.0
      %679 = vmatmul.mubr.f32.gmra.mxu0 %v530
      %v680 = vpop.f32.mrf.mxu0
      %v681 = vadd.f32 0.0, %v680
      %v682 = vpop.f32.mrf.mxu0
      %683 = vdwg.mxu0
      %v684 = vadd.f32 %v426, %v599
      %v685 = vadd.f32 %v428, %v601
      %v686 = vadd.f32 %v503, %v676
      %v687 = vadd.f32 %v432, %v605
      %v688 = vadd.f32 %v434, %v607
      %v689 = vadd.f32 %v508, %v681
      %690 = vrot.lane.b32.xlu0 %v171, 110
      %v691 = vpop.permute.xlu0 %690
      %692 = vrot.lane.b32.xlu0 %v172, 110
      %v693 = vpop.permute.xlu0 %692
      %694 = vrot.lane.b32.xlu0 %v173, 110
      %v695 = vpop.permute.xlu0 %694
      %696 = vrot.lane.b32.xlu0 %v174, 110
      %v697 = vpop.permute.xlu0 %696
      %vm698 = vcmp.lt.s32.totalorder %v186, 110
      %v699 = vsel %vm698, %v695, %v697
      %v700 = vsel %vm698, %v693, %v695
      %v701 = vsel %vm698, %v691, %v693
      %s702 = scalar_lea.vmem %s1, 48
      %v703 = vld [vmem:[%s702] sm:$0xff]
      %v704 = vld [vmem:[%s702 + $0x8] sm:$0xff]
      %v706 = vsel %vm194, %v703, 0
      %v709 = vsel %vm194, %v704, 0
      %711 = vmatprep.subr.mxu0 0.0
      %712 = vmatpush1.msra.mxu0 0.0
      %713 = vmatprep.subr.mxu0 0.0
      %714 = vmatpush1.msra.mxu0 0.0
      %715 = vmatprep.subr.mxu0 0.0
      %716 = vmatpush1.msra.mxu0 0.0
      %717 = vmatprep.subr.mxu0 0.0
      %718 = vmatpush1.msra.mxu0 0.0
      %719 = vmatprep.subr.mxu0 0.0
      %720 = vmatpush1.msra.mxu0 0.0
      %721 = vmatprep.subr.mxu0 0.0
      %722 = vmatpush1.msra.mxu0 0.0
      %723 = vmatprep.subr.mxu0 0.0
      %724 = vmatpush1.msra.mxu0 0.0
      %725 = vmatprep.subr.mxu0 0.0
      %726 = vmatpush1.msra.mxu0 0.0
      %727 = vmatprep.subr.mxu0 0.0
      %728 = vmatpush1.msra.mxu0 0.0
      %729 = vmatprep.subr.mxu0 0.0
      %730 = vmatpush1.msra.mxu0 0.0
      %731 = vmatprep.subr.mxu0 0.0
      %732 = vmatpush1.msra.mxu0 0.0
      %733 = vmatprep.subr.mxu0 0.0
      %734 = vmatpush1.msra.mxu0 0.0
      %735 = vmatprep.subr.mxu0 0.0
      %736 = vmatpush1.msra.mxu0 0.0
      %737 = vmatprep.subr.mxu0 0.0
      %738 = vmatpush1.msra.mxu0 0.0
      %739 = vmatprep.subr.mxu0 0.0
      %740 = vmatpush1.msra.mxu0 0.0
      %741 = vmatprep.subr.mxu0 %v700
      %742 = vmatpush1.msra.mxu0 %v701
      %743 = vmatprep.subr.mxu0 0.0
      %744 = vmatpush2.msra.mxu0 0.0
      %745 = vmatprep.subr.mxu0 0.0
      %746 = vmatpush2.msra.mxu0 0.0
      %747 = vmatprep.subr.mxu0 0.0
      %748 = vmatpush2.msra.mxu0 0.0
      %749 = vmatprep.subr.mxu0 0.0
      %750 = vmatpush2.msra.mxu0 0.0
      %751 = vmatprep.subr.mxu0 0.0
      %752 = vmatpush2.msra.mxu0 0.0
      %753 = vmatprep.subr.mxu0 0.0
      %754 = vmatpush2.msra.mxu0 0.0
      %755 = vmatprep.subr.mxu0 0.0
      %756 = vmatpush2.msra.mxu0 0.0
      %757 = vmatprep.subr.mxu0 0.0
      %758 = vmatpush2.msra.mxu0 0.0
      %759 = vmatprep.subr.mxu0 0.0
      %760 = vmatpush2.msra.mxu0 0.0
      %761 = vmatprep.subr.mxu0 0.0
      %762 = vmatpush2.msra.mxu0 0.0
      %763 = vmatprep.subr.mxu0 0.0
      %764 = vmatpush2.msra.mxu0 0.0
      %765 = vmatprep.subr.mxu0 0.0
      %766 = vmatpush2.msra.mxu0 0.0
      %767 = vmatprep.subr.mxu0 0.0
      %768 = vmatpush2.msra.mxu0 0.0
      %769 = vmatprep.subr.mxu0 0.0
      %770 = vmatpush2.msra.mxu0 0.0
      %771 = vmatprep.subr.mxu0 0.0
      %772 = vmatpush2.msra.mxu0 0.0
      %773 = vmatprep.subr.mxu0 0.0
      %774 = vmatpush2.msra.mxu0 0.0
      %775 = vmatprep.mubr.f32.mxu0 0.0
      %776 = vmatmul.mubr.f32.gmra.mxu0 %v706
      %v777 = vpop.f32.mrf.mxu0
      %v778 = vadd.f32 0.0, %v777
      %v779 = vpop.f32.mrf.mxu0
      %v780 = vadd.f32 0.0, %v779
      %781 = vmatprep.mubr.f32.mxu0 0.0
      %782 = vmatmul.mubr.f32.gmra.mxu0 %v709
      %v783 = vpop.f32.mrf.mxu0
      %v784 = vadd.f32 0.0, %v783
      %v785 = vpop.f32.mrf.mxu0
      %v786 = vadd.f32 0.0, %v785
      %787 = vdwg.mxu0
      %788 = vmatprep.subr.mxu0 0.0
      %789 = vmatpush1.msra.mxu0 0.0
      %790 = vmatprep.subr.mxu0 0.0
      %791 = vmatpush1.msra.mxu0 0.0
      %792 = vmatprep.subr.mxu0 0.0
      %793 = vmatpush1.msra.mxu0 0.0
      %794 = vmatprep.subr.mxu0 0.0
      %795 = vmatpush1.msra.mxu0 0.0
      %796 = vmatprep.subr.mxu0 0.0
      %797 = vmatpush1.msra.mxu0 0.0
      %798 = vmatprep.subr.mxu0 0.0
      %799 = vmatpush1.msra.mxu0 0.0
      %800 = vmatprep.subr.mxu0 0.0
      %801 = vmatpush1.msra.mxu0 0.0
      %802 = vmatprep.subr.mxu0 0.0
      %803 = vmatpush1.msra.mxu0 0.0
      %804 = vmatprep.subr.mxu0 0.0
      %805 = vmatpush1.msra.mxu0 0.0
      %806 = vmatprep.subr.mxu0 0.0
      %807 = vmatpush1.msra.mxu0 0.0
      %808 = vmatprep.subr.mxu0 0.0
      %809 = vmatpush1.msra.mxu0 0.0
      %810 = vmatprep.subr.mxu0 0.0
      %811 = vmatpush1.msra.mxu0 0.0
      %812 = vmatprep.subr.mxu0 0.0
      %813 = vmatpush1.msra.mxu0 0.0
      %814 = vmatprep.subr.mxu0 0.0
      %815 = vmatpush1.msra.mxu0 0.0
      %816 = vmatprep.subr.mxu0 0.0
      %817 = vmatpush1.msra.mxu0 0.0
      %818 = vmatprep.subr.mxu0 0.0
      %819 = vmatpush1.msra.mxu0 %v699
      %820 = vmatprep.subr.mxu0 0.0
      %821 = vmatpush2.msra.mxu0 0.0
      %822 = vmatprep.subr.mxu0 0.0
      %823 = vmatpush2.msra.mxu0 0.0
      %824 = vmatprep.subr.mxu0 0.0
      %825 = vmatpush2.msra.mxu0 0.0
      %826 = vmatprep.subr.mxu0 0.0
      %827 = vmatpush2.msra.mxu0 0.0
      %828 = vmatprep.subr.mxu0 0.0
      %829 = vmatpush2.msra.mxu0 0.0
      %830 = vmatprep.subr.mxu0 0.0
      %831 = vmatpush2.msra.mxu0 0.0
      %832 = vmatprep.subr.mxu0 0.0
      %833 = vmatpush2.msra.mxu0 0.0
      %834 = vmatprep.subr.mxu0 0.0
      %835 = vmatpush2.msra.mxu0 0.0
      %836 = vmatprep.subr.mxu0 0.0
      %837 = vmatpush2.msra.mxu0 0.0
      %838 = vmatprep.subr.mxu0 0.0
      %839 = vmatpush2.msra.mxu0 0.0
      %840 = vmatprep.subr.mxu0 0.0
      %841 = vmatpush2.msra.mxu0 0.0
      %842 = vmatprep.subr.mxu0 0.0
      %843 = vmatpush2.msra.mxu0 0.0
      %844 = vmatprep.subr.mxu0 0.0
      %845 = vmatpush2.msra.mxu0 0.0
      %846 = vmatprep.subr.mxu0 0.0
      %847 = vmatpush2.msra.mxu0 0.0
      %848 = vmatprep.subr.mxu0 0.0
      %849 = vmatpush2.msra.mxu0 0.0
      %850 = vmatprep.subr.mxu0 0.0
      %851 = vmatpush2.msra.mxu0 0.0
      %852 = vmatprep.mubr.f32.mxu0 0.0
      %853 = vmatmul.mubr.f32.gmra.mxu0 %v706
      %v854 = vpop.f32.mrf.mxu0
      %v855 = vadd.f32 0.0, %v854
      %v856 = vpop.f32.mrf.mxu0
      %857 = vmatprep.mubr.f32.mxu0 0.0
      %858 = vmatmul.mubr.f32.gmra.mxu0 %v709
      %v859 = vpop.f32.mrf.mxu0
      %v860 = vadd.f32 0.0, %v859
      %v861 = vpop.f32.mrf.mxu0
      %862 = vdwg.mxu0
      %v863 = vadd.f32 %v684, %v778
      %v864 = vadd.f32 %v685, %v780
      %v865 = vadd.f32 %v686, %v855
      %v866 = vadd.f32 %v687, %v784
      %v867 = vadd.f32 %v688, %v786
      %v868 = vadd.f32 %v689, %v860
      %869 = vrot.lane.b32.xlu0 %v171, 109
      %v870 = vpop.permute.xlu0 %869
      %871 = vrot.lane.b32.xlu0 %v172, 109
      %v872 = vpop.permute.xlu0 %871
      %873 = vrot.lane.b32.xlu0 %v173, 109
      %v874 = vpop.permute.xlu0 %873
      %875 = vrot.lane.b32.xlu0 %v174, 109
      %v876 = vpop.permute.xlu0 %875
      %vm877 = vcmp.lt.s32.totalorder %v186, 109
      %v878 = vsel %vm877, %v874, %v876
      %v879 = vsel %vm877, %v872, %v874
      %v880 = vsel %vm877, %v870, %v872
      %s881 = scalar_lea.vmem %s1, 64
      %v882 = vld [vmem:[%s881] sm:$0xff]
      %v883 = vld [vmem:[%s881 + $0x8] sm:$0xff]
      %v885 = vsel %vm194, %v882, 0
      %v888 = vsel %vm194, %v883, 0
      %890 = vmatprep.subr.mxu0 0.0
      %891 = vmatpush1.msra.mxu0 0.0
      %892 = vmatprep.subr.mxu0 0.0
      %893 = vmatpush1.msra.mxu0 0.0
      %894 = vmatprep.subr.mxu0 0.0
      %895 = vmatpush1.msra.mxu0 0.0
      %896 = vmatprep.subr.mxu0 0.0
      %897 = vmatpush1.msra.mxu0 0.0
      %898 = vmatprep.subr.mxu0 0.0
      %899 = vmatpush1.msra.mxu0 0.0
      %900 = vmatprep.subr.mxu0 0.0
      %901 = vmatpush1.msra.mxu0 0.0
      %902 = vmatprep.subr.mxu0 0.0
      %903 = vmatpush1.msra.mxu0 0.0
      %904 = vmatprep.subr.mxu0 0.0
      %905 = vmatpush1.msra.mxu0 0.0
      %906 = vmatprep.subr.mxu0 0.0
      %907 = vmatpush1.msra.mxu0 0.0
      %908 = vmatprep.subr.mxu0 0.0
      %909 = vmatpush1.msra.mxu0 0.0
      %910 = vmatprep.subr.mxu0 0.0
      %911 = vmatpush1.msra.mxu0 0.0
      %912 = vmatprep.subr.mxu0 0.0
      %913 = vmatpush1.msra.mxu0 0.0
      %914 = vmatprep.subr.mxu0 0.0
      %915 = vmatpush1.msra.mxu0 0.0
      %916 = vmatprep.subr.mxu0 0.0
      %917 = vmatpush1.msra.mxu0 0.0
      %918 = vmatprep.subr.mxu0 0.0
      %919 = vmatpush1.msra.mxu0 0.0
      %920 = vmatprep.subr.mxu0 %v879
      %921 = vmatpush1.msra.mxu0 %v880
      %922 = vmatprep.subr.mxu0 0.0
      %923 = vmatpush2.msra.mxu0 0.0
      %924 = vmatprep.subr.mxu0 0.0
      %925 = vmatpush2.msra.mxu0 0.0
      %926 = vmatprep.subr.mxu0 0.0
      %927 = vmatpush2.msra.mxu0 0.0
      %928 = vmatprep.subr.mxu0 0.0
      %929 = vmatpush2.msra.mxu0 0.0
      %930 = vmatprep.subr.mxu0 0.0
      %931 = vmatpush2.msra.mxu0 0.0
      %932 = vmatprep.subr.mxu0 0.0
      %933 = vmatpush2.msra.mxu0 0.0
      %934 = vmatprep.subr.mxu0 0.0
      %935 = vmatpush2.msra.mxu0 0.0
      %936 = vmatprep.subr.mxu0 0.0
      %937 = vmatpush2.msra.mxu0 0.0
      %938 = vmatprep.subr.mxu0 0.0
      %939 = vmatpush2.msra.mxu0 0.0
      %940 = vmatprep.subr.mxu0 0.0
      %941 = vmatpush2.msra.mxu0 0.0
      %942 = vmatprep.subr.mxu0 0.0
      %943 = vmatpush2.msra.mxu0 0.0
      %944 = vmatprep.subr.mxu0 0.0
      %945 = vmatpush2.msra.mxu0 0.0
      %946 = vmatprep.subr.mxu0 0.0
      %947 = vmatpush2.msra.mxu0 0.0
      %948 = vmatprep.subr.mxu0 0.0
      %949 = vmatpush2.msra.mxu0 0.0
      %950 = vmatprep.subr.mxu0 0.0
      %951 = vmatpush2.msra.mxu0 0.0
      %952 = vmatprep.subr.mxu0 0.0
      %953 = vmatpush2.msra.mxu0 0.0
      %954 = vmatprep.mubr.f32.mxu0 0.0
      %955 = vmatmul.mubr.f32.gmra.mxu0 %v885
      %v956 = vpop.f32.mrf.mxu0
      %v957 = vadd.f32 0.0, %v956
      %v958 = vpop.f32.mrf.mxu0
      %v959 = vadd.f32 0.0, %v958
      %960 = vmatprep.mubr.f32.mxu0 0.0
      %961 = vmatmul.mubr.f32.gmra.mxu0 %v888
      %v962 = vpop.f32.mrf.mxu0
      %v963 = vadd.f32 0.0, %v962
      %v964 = vpop.f32.mrf.mxu0
      %v965 = vadd.f32 0.0, %v964
      %966 = vdwg.mxu0
      %967 = vmatprep.subr.mxu0 0.0
      %968 = vmatpush1.msra.mxu0 0.0
      %969 = vmatprep.subr.mxu0 0.0
      %970 = vmatpush1.msra.mxu0 0.0
      %971 = vmatprep.subr.mxu0 0.0
      %972 = vmatpush1.msra.mxu0 0.0
      %973 = vmatprep.subr.mxu0 0.0
      %974 = vmatpush1.msra.mxu0 0.0
      %975 = vmatprep.subr.mxu0 0.0
      %976 = vmatpush1.msra.mxu0 0.0
      %977 = vmatprep.subr.mxu0 0.0
      %978 = vmatpush1.msra.mxu0 0.0
      %979 = vmatprep.subr.mxu0 0.0
      %980 = vmatpush1.msra.mxu0 0.0
      %981 = vmatprep.subr.mxu0 0.0
      %982 = vmatpush1.msra.mxu0 0.0
      %983 = vmatprep.subr.mxu0 0.0
      %984 = vmatpush1.msra.mxu0 0.0
      %985 = vmatprep.subr.mxu0 0.0
      %986 = vmatpush1.msra.mxu0 0.0
      %987 = vmatprep.subr.mxu0 0.0
      %988 = vmatpush1.msra.mxu0 0.0
      %989 = vmatprep.subr.mxu0 0.0
      %990 = vmatpush1.msra.mxu0 0.0
      %991 = vmatprep.subr.mxu0 0.0
      %992 = vmatpush1.msra.mxu0 0.0
      %993 = vmatprep.subr.mxu0 0.0
      %994 = vmatpush1.msra.mxu0 0.0
      %995 = vmatprep.subr.mxu0 0.0
      %996 = vmatpush1.msra.mxu0 0.0
      %997 = vmatprep.subr.mxu0 0.0
      %998 = vmatpush1.msra.mxu0 %v878
      %999 = vmatprep.subr.mxu0 0.0
      %1000 = vmatpush2.msra.mxu0 0.0
      %1001 = vmatprep.subr.mxu0 0.0
      %1002 = vmatpush2.msra.mxu0 0.0
      %1003 = vmatprep.subr.mxu0 0.0
      %1004 = vmatpush2.msra.mxu0 0.0
      %1005 = vmatprep.subr.mxu0 0.0
      %1006 = vmatpush2.msra.mxu0 0.0
      %1007 = vmatprep.subr.mxu0 0.0
      %1008 = vmatpush2.msra.mxu0 0.0
      %1009 = vmatprep.subr.mxu0 0.0
      %1010 = vmatpush2.msra.mxu0 0.0
      %1011 = vmatprep.subr.mxu0 0.0
      %1012 = vmatpush2.msra.mxu0 0.0
      %1013 = vmatprep.subr.mxu0 0.0
      %1014 = vmatpush2.msra.mxu0 0.0
      %1015 = vmatprep.subr.mxu0 0.0
      %1016 = vmatpush2.msra.mxu0 0.0
      %1017 = vmatprep.subr.mxu0 0.0
      %1018 = vmatpush2.msra.mxu0 0.0
      %1019 = vmatprep.subr.mxu0 0.0
      %1020 = vmatpush2.msra.mxu0 0.0
      %1021 = vmatprep.subr.mxu0 0.0
      %1022 = vmatpush2.msra.mxu0 0.0
      %1023 = vmatprep.subr.mxu0 0.0
      %1024 = vmatpush2.msra.mxu0 0.0
      %1025 = vmatprep.subr.mxu0 0.0
      %1026 = vmatpush2.msra.mxu0 0.0
      %1027 = vmatprep.subr.mxu0 0.0
      %1028 = vmatpush2.msra.mxu0 0.0
      %1029 = vmatprep.subr.mxu0 0.0
      %1030 = vmatpush2.msra.mxu0 0.0
      %1031 = vmatprep.mubr.f32.mxu0 0.0
      %1032 = vmatmul.mubr.f32.gmra.mxu0 %v885
      %v1033 = vpop.f32.mrf.mxu0
      %v1034 = vadd.f32 0.0, %v1033
      %v1035 = vpop.f32.mrf.mxu0
      %1036 = vmatprep.mubr.f32.mxu0 0.0
      %1037 = vmatmul.mubr.f32.gmra.mxu0 %v888
      %v1038 = vpop.f32.mrf.mxu0
      %v1039 = vadd.f32 0.0, %v1038
      %v1040 = vpop.f32.mrf.mxu0
      %1041 = vdwg.mxu0
      %v1042 = vadd.f32 %v863, %v957
      %v1043 = vadd.f32 %v864, %v959
      %v1044 = vadd.f32 %v865, %v1034
      %v1045 = vadd.f32 %v866, %v963
      %v1046 = vadd.f32 %v867, %v965
      %v1047 = vadd.f32 %v868, %v1039
      %1048 = vrot.lane.b32.xlu0 %v171, 108
      %v1049 = vpop.permute.xlu0 %1048
      %1050 = vrot.lane.b32.xlu0 %v172, 108
      %v1051 = vpop.permute.xlu0 %1050
      %1052 = vrot.lane.b32.xlu0 %v173, 108
      %v1053 = vpop.permute.xlu0 %1052
      %1054 = vrot.lane.b32.xlu0 %v174, 108
      %v1055 = vpop.permute.xlu0 %1054
      %vm1056 = vcmp.lt.s32.totalorder %v186, 108
      %v1057 = vsel %vm1056, %v1053, %v1055
      %v1058 = vsel %vm1056, %v1051, %v1053
      %v1059 = vsel %vm1056, %v1049, %v1051
      %s1060 = scalar_lea.vmem %s1, 80
      %v1061 = vld [vmem:[%s1060] sm:$0xff]
      %v1062 = vld [vmem:[%s1060 + $0x8] sm:$0xff]
      %v1064 = vsel %vm194, %v1061, 0
      %v1067 = vsel %vm194, %v1062, 0
      %1069 = vmatprep.subr.mxu0 0.0
      %1070 = vmatpush1.msra.mxu0 0.0
      %1071 = vmatprep.subr.mxu0 0.0
      %1072 = vmatpush1.msra.mxu0 0.0
      %1073 = vmatprep.subr.mxu0 0.0
      %1074 = vmatpush1.msra.mxu0 0.0
      %1075 = vmatprep.subr.mxu0 0.0
      %1076 = vmatpush1.msra.mxu0 0.0
      %1077 = vmatprep.subr.mxu0 0.0
      %1078 = vmatpush1.msra.mxu0 0.0
      %1079 = vmatprep.subr.mxu0 0.0
      %1080 = vmatpush1.msra.mxu0 0.0
      %1081 = vmatprep.subr.mxu0 0.0
      %1082 = vmatpush1.msra.mxu0 0.0
      %1083 = vmatprep.subr.mxu0 0.0
      %1084 = vmatpush1.msra.mxu0 0.0
      %1085 = vmatprep.subr.mxu0 0.0
      %1086 = vmatpush1.msra.mxu0 0.0
      %1087 = vmatprep.subr.mxu0 0.0
      %1088 = vmatpush1.msra.mxu0 0.0
      %1089 = vmatprep.subr.mxu0 0.0
      %1090 = vmatpush1.msra.mxu0 0.0
      %1091 = vmatprep.subr.mxu0 0.0
      %1092 = vmatpush1.msra.mxu0 0.0
      %1093 = vmatprep.subr.mxu0 0.0
      %1094 = vmatpush1.msra.mxu0 0.0
      %1095 = vmatprep.subr.mxu0 0.0
      %1096 = vmatpush1.msra.mxu0 0.0
      %1097 = vmatprep.subr.mxu0 0.0
      %1098 = vmatpush1.msra.mxu0 0.0
      %1099 = vmatprep.subr.mxu0 %v1058
      %1100 = vmatpush1.msra.mxu0 %v1059
      %1101 = vmatprep.subr.mxu0 0.0
      %1102 = vmatpush2.msra.mxu0 0.0
      %1103 = vmatprep.subr.mxu0 0.0
      %1104 = vmatpush2.msra.mxu0 0.0
      %1105 = vmatprep.subr.mxu0 0.0
      %1106 = vmatpush2.msra.mxu0 0.0
      %1107 = vmatprep.subr.mxu0 0.0
      %1108 = vmatpush2.msra.mxu0 0.0
      %1109 = vmatprep.subr.mxu0 0.0
      %1110 = vmatpush2.msra.mxu0 0.0
      %1111 = vmatprep.subr.mxu0 0.0
      %1112 = vmatpush2.msra.mxu0 0.0
      %1113 = vmatprep.subr.mxu0 0.0
      %1114 = vmatpush2.msra.mxu0 0.0
      %1115 = vmatprep.subr.mxu0 0.0
      %1116 = vmatpush2.msra.mxu0 0.0
      %1117 = vmatprep.subr.mxu0 0.0
      %1118 = vmatpush2.msra.mxu0 0.0
      %1119 = vmatprep.subr.mxu0 0.0
      %1120 = vmatpush2.msra.mxu0 0.0
      %1121 = vmatprep.subr.mxu0 0.0
      %1122 = vmatpush2.msra.mxu0 0.0
      %1123 = vmatprep.subr.mxu0 0.0
      %1124 = vmatpush2.msra.mxu0 0.0
      %1125 = vmatprep.subr.mxu0 0.0
      %1126 = vmatpush2.msra.mxu0 0.0
      %1127 = vmatprep.subr.mxu0 0.0
      %1128 = vmatpush2.msra.mxu0 0.0
      %1129 = vmatprep.subr.mxu0 0.0
      %1130 = vmatpush2.msra.mxu0 0.0
      %1131 = vmatprep.subr.mxu0 0.0
      %1132 = vmatpush2.msra.mxu0 0.0
      %1133 = vmatprep.mubr.f32.mxu0 0.0
      %1134 = vmatmul.mubr.f32.gmra.mxu0 %v1064
      %v1135 = vpop.f32.mrf.mxu0
      %v1136 = vadd.f32 0.0, %v1135
      %v1137 = vpop.f32.mrf.mxu0
      %v1138 = vadd.f32 0.0, %v1137
      %1139 = vmatprep.mubr.f32.mxu0 0.0
      %1140 = vmatmul.mubr.f32.gmra.mxu0 %v1067
      %v1141 = vpop.f32.mrf.mxu0
      %v1142 = vadd.f32 0.0, %v1141
      %v1143 = vpop.f32.mrf.mxu0
      %v1144 = vadd.f32 0.0, %v1143
      %1145 = vdwg.mxu0
      %1146 = vmatprep.subr.mxu0 0.0
      %1147 = vmatpush1.msra.mxu0 0.0
      %1148 = vmatprep.subr.mxu0 0.0
      %1149 = vmatpush1.msra.mxu0 0.0
      %1150 = vmatprep.subr.mxu0 0.0
      %1151 = vmatpush1.msra.mxu0 0.0
      %1152 = vmatprep.subr.mxu0 0.0
      %1153 = vmatpush1.msra.mxu0 0.0
      %1154 = vmatprep.subr.mxu0 0.0
      %1155 = vmatpush1.msra.mxu0 0.0
      %1156 = vmatprep.subr.mxu0 0.0
      %1157 = vmatpush1.msra.mxu0 0.0
      %1158 = vmatprep.subr.mxu0 0.0
      %1159 = vmatpush1.msra.mxu0 0.0
      %1160 = vmatprep.subr.mxu0 0.0
      %1161 = vmatpush1.msra.mxu0 0.0
      %1162 = vmatprep.subr.mxu0 0.0
      %1163 = vmatpush1.msra.mxu0 0.0
      %1164 = vmatprep.subr.mxu0 0.0
      %1165 = vmatpush1.msra.mxu0 0.0
      %1166 = vmatprep.subr.mxu0 0.0
      %1167 = vmatpush1.msra.mxu0 0.0
      %1168 = vmatprep.subr.mxu0 0.0
      %1169 = vmatpush1.msra.mxu0 0.0
      %1170 = vmatprep.subr.mxu0 0.0
      %1171 = vmatpush1.msra.mxu0 0.0
      %1172 = vmatprep.subr.mxu0 0.0
      %1173 = vmatpush1.msra.mxu0 0.0
      %1174 = vmatprep.subr.mxu0 0.0
      %1175 = vmatpush1.msra.mxu0 0.0
      %1176 = vmatprep.subr.mxu0 0.0
      %1177 = vmatpush1.msra.mxu0 %v1057
      %1178 = vmatprep.subr.mxu0 0.0
      %1179 = vmatpush2.msra.mxu0 0.0
      %1180 = vmatprep.subr.mxu0 0.0
      %1181 = vmatpush2.msra.mxu0 0.0
      %1182 = vmatprep.subr.mxu0 0.0
      %1183 = vmatpush2.msra.mxu0 0.0
      %1184 = vmatprep.subr.mxu0 0.0
      %1185 = vmatpush2.msra.mxu0 0.0
      %1186 = vmatprep.subr.mxu0 0.0
      %1187 = vmatpush2.msra.mxu0 0.0
      %1188 = vmatprep.subr.mxu0 0.0
      %1189 = vmatpush2.msra.mxu0 0.0
      %1190 = vmatprep.subr.mxu0 0.0
      %1191 = vmatpush2.msra.mxu0 0.0
      %1192 = vmatprep.subr.mxu0 0.0
      %1193 = vmatpush2.msra.mxu0 0.0
      %1194 = vmatprep.subr.mxu0 0.0
      %1195 = vmatpush2.msra.mxu0 0.0
      %1196 = vmatprep.subr.mxu0 0.0
      %1197 = vmatpush2.msra.mxu0 0.0
      %1198 = vmatprep.subr.mxu0 0.0
      %1199 = vmatpush2.msra.mxu0 0.0
      %1200 = vmatprep.subr.mxu0 0.0
      %1201 = vmatpush2.msra.mxu0 0.0
      %1202 = vmatprep.subr.mxu0 0.0
      %1203 = vmatpush2.msra.mxu0 0.0
      %1204 = vmatprep.subr.mxu0 0.0
      %1205 = vmatpush2.msra.mxu0 0.0
      %1206 = vmatprep.subr.mxu0 0.0
      %1207 = vmatpush2.msra.mxu0 0.0
      %1208 = vmatprep.subr.mxu0 0.0
      %1209 = vmatpush2.msra.mxu0 0.0
      %1210 = vmatprep.mubr.f32.mxu0 0.0
      %1211 = vmatmul.mubr.f32.gmra.mxu0 %v1064
      %v1212 = vpop.f32.mrf.mxu0
      %v1213 = vadd.f32 0.0, %v1212
      %v1214 = vpop.f32.mrf.mxu0
      %1215 = vmatprep.mubr.f32.mxu0 0.0
      %1216 = vmatmul.mubr.f32.gmra.mxu0 %v1067
      %v1217 = vpop.f32.mrf.mxu0
      %v1218 = vadd.f32 0.0, %v1217
      %v1219 = vpop.f32.mrf.mxu0
      %1220 = vdwg.mxu0
      %v1221 = vadd.f32 %v1042, %v1136
      %v1222 = vadd.f32 %v1043, %v1138
      %v1223 = vadd.f32 %v1044, %v1213
      %v1224 = vadd.f32 %v1045, %v1142
      %v1225 = vadd.f32 %v1046, %v1144
      %v1226 = vadd.f32 %v1047, %v1218
      %1227 = vrot.lane.b32.xlu0 %v171, 92
      %v1228 = vpop.permute.xlu0 %1227
      %1229 = vrot.lane.b32.xlu0 %v172, 92
      %v1230 = vpop.permute.xlu0 %1229
      %1231 = vrot.lane.b32.xlu0 %v173, 92
      %v1232 = vpop.permute.xlu0 %1231
      %1233 = vrot.lane.b32.xlu0 %v174, 92
      %v1234 = vpop.permute.xlu0 %1233
      %vm1235 = vcmp.lt.s32.totalorder %v186, 92
      %v1236 = vsel %vm1235, %v1232, %v1234
      %v1237 = vsel %vm1235, %v1230, %v1232
      %v1238 = vsel %vm1235, %v1228, %v1230
      %s1239 = scalar_lea.vmem %s1, 96
      %v1240 = vld [vmem:[%s1239] sm:$0xff]
      %v1241 = vld [vmem:[%s1239 + $0x8] sm:$0xff]
      %v1243 = vsel %vm194, %v1240, 0
      %v1246 = vsel %vm194, %v1241, 0
      %1248 = vmatprep.subr.mxu0 0.0
      %1249 = vmatpush1.msra.mxu0 0.0
      %1250 = vmatprep.subr.mxu0 0.0
      %1251 = vmatpush1.msra.mxu0 0.0
      %1252 = vmatprep.subr.mxu0 0.0
      %1253 = vmatpush1.msra.mxu0 0.0
      %1254 = vmatprep.subr.mxu0 0.0
      %1255 = vmatpush1.msra.mxu0 0.0
      %1256 = vmatprep.subr.mxu0 0.0
      %1257 = vmatpush1.msra.mxu0 0.0
      %1258 = vmatprep.subr.mxu0 0.0
      %1259 = vmatpush1.msra.mxu0 0.0
      %1260 = vmatprep.subr.mxu0 0.0
      %1261 = vmatpush1.msra.mxu0 0.0
      %1262 = vmatprep.subr.mxu0 0.0
      %1263 = vmatpush1.msra.mxu0 0.0
      %1264 = vmatprep.subr.mxu0 0.0
      %1265 = vmatpush1.msra.mxu0 0.0
      %1266 = vmatprep.subr.mxu0 0.0
      %1267 = vmatpush1.msra.mxu0 0.0
      %1268 = vmatprep.subr.mxu0 0.0
      %1269 = vmatpush1.msra.mxu0 0.0
      %1270 = vmatprep.subr.mxu0 0.0
      %1271 = vmatpush1.msra.mxu0 0.0
      %1272 = vmatprep.subr.mxu0 0.0
      %1273 = vmatpush1.msra.mxu0 0.0
      %1274 = vmatprep.subr.mxu0 0.0
      %1275 = vmatpush1.msra.mxu0 0.0
      %1276 = vmatprep.subr.mxu0 0.0
      %1277 = vmatpush1.msra.mxu0 0.0
      %1278 = vmatprep.subr.mxu0 %v1237
      %1279 = vmatpush1.msra.mxu0 %v1238
      %1280 = vmatprep.subr.mxu0 0.0
      %1281 = vmatpush2.msra.mxu0 0.0
      %1282 = vmatprep.subr.mxu0 0.0
      %1283 = vmatpush2.msra.mxu0 0.0
      %1284 = vmatprep.subr.mxu0 0.0
      %1285 = vmatpush2.msra.mxu0 0.0
      %1286 = vmatprep.subr.mxu0 0.0
      %1287 = vmatpush2.msra.mxu0 0.0
      %1288 = vmatprep.subr.mxu0 0.0
      %1289 = vmatpush2.msra.mxu0 0.0
      %1290 = vmatprep.subr.mxu0 0.0
      %1291 = vmatpush2.msra.mxu0 0.0
      %1292 = vmatprep.subr.mxu0 0.0
      %1293 = vmatpush2.msra.mxu0 0.0
      %1294 = vmatprep.subr.mxu0 0.0
      %1295 = vmatpush2.msra.mxu0 0.0
      %1296 = vmatprep.subr.mxu0 0.0
      %1297 = vmatpush2.msra.mxu0 0.0
      %1298 = vmatprep.subr.mxu0 0.0
      %1299 = vmatpush2.msra.mxu0 0.0
      %1300 = vmatprep.subr.mxu0 0.0
      %1301 = vmatpush2.msra.mxu0 0.0
      %1302 = vmatprep.subr.mxu0 0.0
      %1303 = vmatpush2.msra.mxu0 0.0
      %1304 = vmatprep.subr.mxu0 0.0
      %1305 = vmatpush2.msra.mxu0 0.0
      %1306 = vmatprep.subr.mxu0 0.0
      %1307 = vmatpush2.msra.mxu0 0.0
      %1308 = vmatprep.subr.mxu0 0.0
      %1309 = vmatpush2.msra.mxu0 0.0
      %1310 = vmatprep.subr.mxu0 0.0
      %1311 = vmatpush2.msra.mxu0 0.0
      %1312 = vmatprep.mubr.f32.mxu0 0.0
      %1313 = vmatmul.mubr.f32.gmra.mxu0 %v1243
      %v1314 = vpop.f32.mrf.mxu0
      %v1315 = vadd.f32 0.0, %v1314
      %v1316 = vpop.f32.mrf.mxu0
      %v1317 = vadd.f32 0.0, %v1316
      %1318 = vmatprep.mubr.f32.mxu0 0.0
      %1319 = vmatmul.mubr.f32.gmra.mxu0 %v1246
      %v1320 = vpop.f32.mrf.mxu0
      %v1321 = vadd.f32 0.0, %v1320
      %v1322 = vpop.f32.mrf.mxu0
      %v1323 = vadd.f32 0.0, %v1322
      %1324 = vdwg.mxu0
      %1325 = vmatprep.subr.mxu0 0.0
      %1326 = vmatpush1.msra.mxu0 0.0
      %1327 = vmatprep.subr.mxu0 0.0
      %1328 = vmatpush1.msra.mxu0 0.0
      %1329 = vmatprep.subr.mxu0 0.0
      %1330 = vmatpush1.msra.mxu0 0.0
      %1331 = vmatprep.subr.mxu0 0.0
      %1332 = vmatpush1.msra.mxu0 0.0
      %1333 = vmatprep.subr.mxu0 0.0
      %1334 = vmatpush1.msra.mxu0 0.0
      %1335 = vmatprep.subr.mxu0 0.0
      %1336 = vmatpush1.msra.mxu0 0.0
      %1337 = vmatprep.subr.mxu0 0.0
      %1338 = vmatpush1.msra.mxu0 0.0
      %1339 = vmatprep.subr.mxu0 0.0
      %1340 = vmatpush1.msra.mxu0 0.0
      %1341 = vmatprep.subr.mxu0 0.0
      %1342 = vmatpush1.msra.mxu0 0.0
      %1343 = vmatprep.subr.mxu0 0.0
      %1344 = vmatpush1.msra.mxu0 0.0
      %1345 = vmatprep.subr.mxu0 0.0
      %1346 = vmatpush1.msra.mxu0 0.0
      %1347 = vmatprep.subr.mxu0 0.0
      %1348 = vmatpush1.msra.mxu0 0.0
      %1349 = vmatprep.subr.mxu0 0.0
      %1350 = vmatpush1.msra.mxu0 0.0
      %1351 = vmatprep.subr.mxu0 0.0
      %1352 = vmatpush1.msra.mxu0 0.0
      %1353 = vmatprep.subr.mxu0 0.0
      %1354 = vmatpush1.msra.mxu0 0.0
      %1355 = vmatprep.subr.mxu0 0.0
      %1356 = vmatpush1.msra.mxu0 %v1236
      %1357 = vmatprep.subr.mxu0 0.0
      %1358 = vmatpush2.msra.mxu0 0.0
      %1359 = vmatprep.subr.mxu0 0.0
      %1360 = vmatpush2.msra.mxu0 0.0
      %1361 = vmatprep.subr.mxu0 0.0
      %1362 = vmatpush2.msra.mxu0 0.0
      %1363 = vmatprep.subr.mxu0 0.0
      %1364 = vmatpush2.msra.mxu0 0.0
      %1365 = vmatprep.subr.mxu0 0.0
      %1366 = vmatpush2.msra.mxu0 0.0
      %1367 = vmatprep.subr.mxu0 0.0
      %1368 = vmatpush2.msra.mxu0 0.0
      %1369 = vmatprep.subr.mxu0 0.0
      %1370 = vmatpush2.msra.mxu0 0.0
      %1371 = vmatprep.subr.mxu0 0.0
      %1372 = vmatpush2.msra.mxu0 0.0
      %1373 = vmatprep.subr.mxu0 0.0
      %1374 = vmatpush2.msra.mxu0 0.0
      %1375 = vmatprep.subr.mxu0 0.0
      %1376 = vmatpush2.msra.mxu0 0.0
      %1377 = vmatprep.subr.mxu0 0.0
      %1378 = vmatpush2.msra.mxu0 0.0
      %1379 = vmatprep.subr.mxu0 0.0
      %1380 = vmatpush2.msra.mxu0 0.0
      %1381 = vmatprep.subr.mxu0 0.0
      %1382 = vmatpush2.msra.mxu0 0.0
      %1383 = vmatprep.subr.mxu0 0.0
      %1384 = vmatpush2.msra.mxu0 0.0
      %1385 = vmatprep.subr.mxu0 0.0
      %1386 = vmatpush2.msra.mxu0 0.0
      %1387 = vmatprep.subr.mxu0 0.0
      %1388 = vmatpush2.msra.mxu0 0.0
      %1389 = vmatprep.mubr.f32.mxu0 0.0
      %1390 = vmatmul.mubr.f32.gmra.mxu0 %v1243
      %v1391 = vpop.f32.mrf.mxu0
      %v1392 = vadd.f32 0.0, %v1391
      %v1393 = vpop.f32.mrf.mxu0
      %1394 = vmatprep.mubr.f32.mxu0 0.0
      %1395 = vmatmul.mubr.f32.gmra.mxu0 %v1246
      %v1396 = vpop.f32.mrf.mxu0
      %v1397 = vadd.f32 0.0, %v1396
      %v1398 = vpop.f32.mrf.mxu0
      %1399 = vdwg.mxu0
      %v1400 = vadd.f32 %v1221, %v1315
      %v1401 = vadd.f32 %v1222, %v1317
      %v1402 = vadd.f32 %v1223, %v1392
      %v1403 = vadd.f32 %v1224, %v1321
      %v1404 = vadd.f32 %v1225, %v1323
      %v1405 = vadd.f32 %v1226, %v1397
      %1406 = vrot.lane.b32.xlu0 %v171, 91
      %v1407 = vpop.permute.xlu0 %1406
      %1408 = vrot.lane.b32.xlu0 %v172, 91
      %v1409 = vpop.permute.xlu0 %1408
      %1410 = vrot.lane.b32.xlu0 %v173, 91
      %v1411 = vpop.permute.xlu0 %1410
      %1412 = vrot.lane.b32.xlu0 %v174, 91
      %v1413 = vpop.permute.xlu0 %1412
      %vm1414 = vcmp.lt.s32.totalorder %v186, 91
      %v1415 = vsel %vm1414, %v1411, %v1413
      %v1416 = vsel %vm1414, %v1409, %v1411
      %v1417 = vsel %vm1414, %v1407, %v1409
      %s1418 = scalar_lea.vmem %s1, 112
      %v1419 = vld [vmem:[%s1418] sm:$0xff]
      %v1420 = vld [vmem:[%s1418 + $0x8] sm:$0xff]
      %v1422 = vsel %vm194, %v1419, 0
      %v1425 = vsel %vm194, %v1420, 0
      %1427 = vmatprep.subr.mxu0 0.0
      %1428 = vmatpush1.msra.mxu0 0.0
      %1429 = vmatprep.subr.mxu0 0.0
      %1430 = vmatpush1.msra.mxu0 0.0
      %1431 = vmatprep.subr.mxu0 0.0
      %1432 = vmatpush1.msra.mxu0 0.0
      %1433 = vmatprep.subr.mxu0 0.0
      %1434 = vmatpush1.msra.mxu0 0.0
      %1435 = vmatprep.subr.mxu0 0.0
      %1436 = vmatpush1.msra.mxu0 0.0
      %1437 = vmatprep.subr.mxu0 0.0
      %1438 = vmatpush1.msra.mxu0 0.0
      %1439 = vmatprep.subr.mxu0 0.0
      %1440 = vmatpush1.msra.mxu0 0.0
      %1441 = vmatprep.subr.mxu0 0.0
      %1442 = vmatpush1.msra.mxu0 0.0
      %1443 = vmatprep.subr.mxu0 0.0
      %1444 = vmatpush1.msra.mxu0 0.0
      %1445 = vmatprep.subr.mxu0 0.0
      %1446 = vmatpush1.msra.mxu0 0.0
      %1447 = vmatprep.subr.mxu0 0.0
      %1448 = vmatpush1.msra.mxu0 0.0
      %1449 = vmatprep.subr.mxu0 0.0
      %1450 = vmatpush1.msra.mxu0 0.0
      %1451 = vmatprep.subr.mxu0 0.0
      %1452 = vmatpush1.msra.mxu0 0.0
      %1453 = vmatprep.subr.mxu0 0.0
      %1454 = vmatpush1.msra.mxu0 0.0
      %1455 = vmatprep.subr.mxu0 0.0
      %1456 = vmatpush1.msra.mxu0 0.0
      %1457 = vmatprep.subr.mxu0 %v1416
      %1458 = vmatpush1.msra.mxu0 %v1417
      %1459 = vmatprep.subr.mxu0 0.0
      %1460 = vmatpush2.msra.mxu0 0.0
      %1461 = vmatprep.subr.mxu0 0.0
      %1462 = vmatpush2.msra.mxu0 0.0
      %1463 = vmatprep.subr.mxu0 0.0
      %1464 = vmatpush2.msra.mxu0 0.0
      %1465 = vmatprep.subr.mxu0 0.0
      %1466 = vmatpush2.msra.mxu0 0.0
      %1467 = vmatprep.subr.mxu0 0.0
      %1468 = vmatpush2.msra.mxu0 0.0
      %1469 = vmatprep.subr.mxu0 0.0
      %1470 = vmatpush2.msra.mxu0 0.0
      %1471 = vmatprep.subr.mxu0 0.0
      %1472 = vmatpush2.msra.mxu0 0.0
      %1473 = vmatprep.subr.mxu0 0.0
      %1474 = vmatpush2.msra.mxu0 0.0
      %1475 = vmatprep.subr.mxu0 0.0
      %1476 = vmatpush2.msra.mxu0 0.0
      %1477 = vmatprep.subr.mxu0 0.0
      %1478 = vmatpush2.msra.mxu0 0.0
      %1479 = vmatprep.subr.mxu0 0.0
      %1480 = vmatpush2.msra.mxu0 0.0
      %1481 = vmatprep.subr.mxu0 0.0
      %1482 = vmatpush2.msra.mxu0 0.0
      %1483 = vmatprep.subr.mxu0 0.0
      %1484 = vmatpush2.msra.mxu0 0.0
      %1485 = vmatprep.subr.mxu0 0.0
      %1486 = vmatpush2.msra.mxu0 0.0
      %1487 = vmatprep.subr.mxu0 0.0
      %1488 = vmatpush2.msra.mxu0 0.0
      %1489 = vmatprep.subr.mxu0 0.0
      %1490 = vmatpush2.msra.mxu0 0.0
      %1491 = vmatprep.mubr.f32.mxu0 0.0
      %1492 = vmatmul.mubr.f32.gmra.mxu0 %v1422
      %v1493 = vpop.f32.mrf.mxu0
      %v1494 = vadd.f32 0.0, %v1493
      %v1495 = vpop.f32.mrf.mxu0
      %v1496 = vadd.f32 0.0, %v1495
      %1497 = vmatprep.mubr.f32.mxu0 0.0
      %1498 = vmatmul.mubr.f32.gmra.mxu0 %v1425
      %v1499 = vpop.f32.mrf.mxu0
      %v1500 = vadd.f32 0.0, %v1499
      %v1501 = vpop.f32.mrf.mxu0
      %v1502 = vadd.f32 0.0, %v1501
      %1503 = vdwg.mxu0
      %1504 = vmatprep.subr.mxu0 0.0
      %1505 = vmatpush1.msra.mxu0 0.0
      %1506 = vmatprep.subr.mxu0 0.0
      %1507 = vmatpush1.msra.mxu0 0.0
      %1508 = vmatprep.subr.mxu0 0.0
      %1509 = vmatpush1.msra.mxu0 0.0
      %1510 = vmatprep.subr.mxu0 0.0
      %1511 = vmatpush1.msra.mxu0 0.0
      %1512 = vmatprep.subr.mxu0 0.0
      %1513 = vmatpush1.msra.mxu0 0.0
      %1514 = vmatprep.subr.mxu0 0.0
      %1515 = vmatpush1.msra.mxu0 0.0
      %1516 = vmatprep.subr.mxu0 0.0
      %1517 = vmatpush1.msra.mxu0 0.0
      %1518 = vmatprep.subr.mxu0 0.0
      %1519 = vmatpush1.msra.mxu0 0.0
      %1520 = vmatprep.subr.mxu0 0.0
      %1521 = vmatpush1.msra.mxu0 0.0
      %1522 = vmatprep.subr.mxu0 0.0
      %1523 = vmatpush1.msra.mxu0 0.0
      %1524 = vmatprep.subr.mxu0 0.0
      %1525 = vmatpush1.msra.mxu0 0.0
      %1526 = vmatprep.subr.mxu0 0.0
      %1527 = vmatpush1.msra.mxu0 0.0
      %1528 = vmatprep.subr.mxu0 0.0
      %1529 = vmatpush1.msra.mxu0 0.0
      %1530 = vmatprep.subr.mxu0 0.0
      %1531 = vmatpush1.msra.mxu0 0.0
      %1532 = vmatprep.subr.mxu0 0.0
      %1533 = vmatpush1.msra.mxu0 0.0
      %1534 = vmatprep.subr.mxu0 0.0
      %1535 = vmatpush1.msra.mxu0 %v1415
      %1536 = vmatprep.subr.mxu0 0.0
      %1537 = vmatpush2.msra.mxu0 0.0
      %1538 = vmatprep.subr.mxu0 0.0
      %1539 = vmatpush2.msra.mxu0 0.0
      %1540 = vmatprep.subr.mxu0 0.0
      %1541 = vmatpush2.msra.mxu0 0.0
      %1542 = vmatprep.subr.mxu0 0.0
      %1543 = vmatpush2.msra.mxu0 0.0
      %1544 = vmatprep.subr.mxu0 0.0
      %1545 = vmatpush2.msra.mxu0 0.0
      %1546 = vmatprep.subr.mxu0 0.0
      %1547 = vmatpush2.msra.mxu0 0.0
      %1548 = vmatprep.subr.mxu0 0.0
      %1549 = vmatpush2.msra.mxu0 0.0
      %1550 = vmatprep.subr.mxu0 0.0
      %1551 = vmatpush2.msra.mxu0 0.0
      %1552 = vmatprep.subr.mxu0 0.0
      %1553 = vmatpush2.msra.mxu0 0.0
      %1554 = vmatprep.subr.mxu0 0.0
      %1555 = vmatpush2.msra.mxu0 0.0
      %1556 = vmatprep.subr.mxu0 0.0
      %1557 = vmatpush2.msra.mxu0 0.0
      %1558 = vmatprep.subr.mxu0 0.0
      %1559 = vmatpush2.msra.mxu0 0.0
      %1560 = vmatprep.subr.mxu0 0.0
      %1561 = vmatpush2.msra.mxu0 0.0
      %1562 = vmatprep.subr.mxu0 0.0
      %1563 = vmatpush2.msra.mxu0 0.0
      %1564 = vmatprep.subr.mxu0 0.0
      %1565 = vmatpush2.msra.mxu0 0.0
      %1566 = vmatprep.subr.mxu0 0.0
      %1567 = vmatpush2.msra.mxu0 0.0
      %1568 = vmatprep.mubr.f32.mxu0 0.0
      %1569 = vmatmul.mubr.f32.gmra.mxu0 %v1422
      %v1570 = vpop.f32.mrf.mxu0
      %v1571 = vadd.f32 0.0, %v1570
      %v1572 = vpop.f32.mrf.mxu0
      %1573 = vmatprep.mubr.f32.mxu0 0.0
      %1574 = vmatmul.mubr.f32.gmra.mxu0 %v1425
      %v1575 = vpop.f32.mrf.mxu0
      %v1576 = vadd.f32 0.0, %v1575
      %v1577 = vpop.f32.mrf.mxu0
      %1578 = vdwg.mxu0
      %v1579 = vadd.f32 %v1400, %v1494
      %v1580 = vadd.f32 %v1401, %v1496
      %v1581 = vadd.f32 %v1402, %v1571
      %v1582 = vadd.f32 %v1403, %v1500
      %v1583 = vadd.f32 %v1404, %v1502
      %v1584 = vadd.f32 %v1405, %v1576
      %1585 = vrot.lane.b32.xlu0 %v171, 90
      %v1586 = vpop.permute.xlu0 %1585
      %1587 = vrot.lane.b32.xlu0 %v172, 90
      %v1588 = vpop.permute.xlu0 %1587
      %1589 = vrot.lane.b32.xlu0 %v173, 90
      %v1590 = vpop.permute.xlu0 %1589
      %1591 = vrot.lane.b32.xlu0 %v174, 90
      %v1592 = vpop.permute.xlu0 %1591
      %vm1593 = vcmp.lt.s32.totalorder %v186, 90
      %v1594 = vsel %vm1593, %v1590, %v1592
      %v1595 = vsel %vm1593, %v1588, %v1590
      %v1596 = vsel %vm1593, %v1586, %v1588
      %s1597 = scalar_lea.vmem %s1, 128
      %v1598 = vld [vmem:[%s1597] sm:$0xff]
      %v1599 = vld [vmem:[%s1597 + $0x8] sm:$0xff]
      %v1601 = vsel %vm194, %v1598, 0
      %v1604 = vsel %vm194, %v1599, 0
      %1606 = vmatprep.subr.mxu0 0.0
      %1607 = vmatpush1.msra.mxu0 0.0
      %1608 = vmatprep.subr.mxu0 0.0
      %1609 = vmatpush1.msra.mxu0 0.0
      %1610 = vmatprep.subr.mxu0 0.0
      %1611 = vmatpush1.msra.mxu0 0.0
      %1612 = vmatprep.subr.mxu0 0.0
      %1613 = vmatpush1.msra.mxu0 0.0
      %1614 = vmatprep.subr.mxu0 0.0
      %1615 = vmatpush1.msra.mxu0 0.0
      %1616 = vmatprep.subr.mxu0 0.0
      %1617 = vmatpush1.msra.mxu0 0.0
      %1618 = vmatprep.subr.mxu0 0.0
      %1619 = vmatpush1.msra.mxu0 0.0
      %1620 = vmatprep.subr.mxu0 0.0
      %1621 = vmatpush1.msra.mxu0 0.0
      %1622 = vmatprep.subr.mxu0 0.0
      %1623 = vmatpush1.msra.mxu0 0.0
      %1624 = vmatprep.subr.mxu0 0.0
      %1625 = vmatpush1.msra.mxu0 0.0
      %1626 = vmatprep.subr.mxu0 0.0
      %1627 = vmatpush1.msra.mxu0 0.0
      %1628 = vmatprep.subr.mxu0 0.0
      %1629 = vmatpush1.msra.mxu0 0.0
      %1630 = vmatprep.subr.mxu0 0.0
      %1631 = vmatpush1.msra.mxu0 0.0
      %1632 = vmatprep.subr.mxu0 0.0
      %1633 = vmatpush1.msra.mxu0 0.0
      %1634 = vmatprep.subr.mxu0 0.0
      %1635 = vmatpush1.msra.mxu0 0.0
      %1636 = vmatprep.subr.mxu0 %v1595
      %1637 = vmatpush1.msra.mxu0 %v1596
      %1638 = vmatprep.subr.mxu0 0.0
      %1639 = vmatpush2.msra.mxu0 0.0
      %1640 = vmatprep.subr.mxu0 0.0
      %1641 = vmatpush2.msra.mxu0 0.0
      %1642 = vmatprep.subr.mxu0 0.0
      %1643 = vmatpush2.msra.mxu0 0.0
      %1644 = vmatprep.subr.mxu0 0.0
      %1645 = vmatpush2.msra.mxu0 0.0
      %1646 = vmatprep.subr.mxu0 0.0
      %1647 = vmatpush2.msra.mxu0 0.0
      %1648 = vmatprep.subr.mxu0 0.0
      %1649 = vmatpush2.msra.mxu0 0.0
      %1650 = vmatprep.subr.mxu0 0.0
      %1651 = vmatpush2.msra.mxu0 0.0
      %1652 = vmatprep.subr.mxu0 0.0
      %1653 = vmatpush2.msra.mxu0 0.0
      %1654 = vmatprep.subr.mxu0 0.0
      %1655 = vmatpush2.msra.mxu0 0.0
      %1656 = vmatprep.subr.mxu0 0.0
      %1657 = vmatpush2.msra.mxu0 0.0
      %1658 = vmatprep.subr.mxu0 0.0
      %1659 = vmatpush2.msra.mxu0 0.0
      %1660 = vmatprep.subr.mxu0 0.0
      %1661 = vmatpush2.msra.mxu0 0.0
      %1662 = vmatprep.subr.mxu0 0.0
      %1663 = vmatpush2.msra.mxu0 0.0
      %1664 = vmatprep.subr.mxu0 0.0
      %1665 = vmatpush2.msra.mxu0 0.0
      %1666 = vmatprep.subr.mxu0 0.0
      %1667 = vmatpush2.msra.mxu0 0.0
      %1668 = vmatprep.subr.mxu0 0.0
      %1669 = vmatpush2.msra.mxu0 0.0
      %1670 = vmatprep.mubr.f32.mxu0 0.0
      %1671 = vmatmul.mubr.f32.gmra.mxu0 %v1601
      %v1672 = vpop.f32.mrf.mxu0
      %v1673 = vadd.f32 0.0, %v1672
      %v1674 = vpop.f32.mrf.mxu0
      %v1675 = vadd.f32 0.0, %v1674
      %1676 = vmatprep.mubr.f32.mxu0 0.0
      %1677 = vmatmul.mubr.f32.gmra.mxu0 %v1604
      %v1678 = vpop.f32.mrf.mxu0
      %v1679 = vadd.f32 0.0, %v1678
      %v1680 = vpop.f32.mrf.mxu0
      %v1681 = vadd.f32 0.0, %v1680
      %1682 = vdwg.mxu0
      %1683 = vmatprep.subr.mxu0 0.0
      %1684 = vmatpush1.msra.mxu0 0.0
      %1685 = vmatprep.subr.mxu0 0.0
      %1686 = vmatpush1.msra.mxu0 0.0
      %1687 = vmatprep.subr.mxu0 0.0
      %1688 = vmatpush1.msra.mxu0 0.0
      %1689 = vmatprep.subr.mxu0 0.0
      %1690 = vmatpush1.msra.mxu0 0.0
      %1691 = vmatprep.subr.mxu0 0.0
      %1692 = vmatpush1.msra.mxu0 0.0
      %1693 = vmatprep.subr.mxu0 0.0
      %1694 = vmatpush1.msra.mxu0 0.0
      %1695 = vmatprep.subr.mxu0 0.0
      %1696 = vmatpush1.msra.mxu0 0.0
      %1697 = vmatprep.subr.mxu0 0.0
      %1698 = vmatpush1.msra.mxu0 0.0
      %1699 = vmatprep.subr.mxu0 0.0
      %1700 = vmatpush1.msra.mxu0 0.0
      %1701 = vmatprep.subr.mxu0 0.0
      %1702 = vmatpush1.msra.mxu0 0.0
      %1703 = vmatprep.subr.mxu0 0.0
      %1704 = vmatpush1.msra.mxu0 0.0
      %1705 = vmatprep.subr.mxu0 0.0
      %1706 = vmatpush1.msra.mxu0 0.0
      %1707 = vmatprep.subr.mxu0 0.0
      %1708 = vmatpush1.msra.mxu0 0.0
      %1709 = vmatprep.subr.mxu0 0.0
      %1710 = vmatpush1.msra.mxu0 0.0
      %1711 = vmatprep.subr.mxu0 0.0
      %1712 = vmatpush1.msra.mxu0 0.0
      %1713 = vmatprep.subr.mxu0 0.0
      %1714 = vmatpush1.msra.mxu0 %v1594
      %1715 = vmatprep.subr.mxu0 0.0
      %1716 = vmatpush2.msra.mxu0 0.0
      %1717 = vmatprep.subr.mxu0 0.0
      %1718 = vmatpush2.msra.mxu0 0.0
      %1719 = vmatprep.subr.mxu0 0.0
      %1720 = vmatpush2.msra.mxu0 0.0
      %1721 = vmatprep.subr.mxu0 0.0
      %1722 = vmatpush2.msra.mxu0 0.0
      %1723 = vmatprep.subr.mxu0 0.0
      %1724 = vmatpush2.msra.mxu0 0.0
      %1725 = vmatprep.subr.mxu0 0.0
      %1726 = vmatpush2.msra.mxu0 0.0
      %1727 = vmatprep.subr.mxu0 0.0
      %1728 = vmatpush2.msra.mxu0 0.0
      %1729 = vmatprep.subr.mxu0 0.0
      %1730 = vmatpush2.msra.mxu0 0.0
      %1731 = vmatprep.subr.mxu0 0.0
      %1732 = vmatpush2.msra.mxu0 0.0
      %1733 = vmatprep.subr.mxu0 0.0
      %1734 = vmatpush2.msra.mxu0 0.0
      %1735 = vmatprep.subr.mxu0 0.0
      %1736 = vmatpush2.msra.mxu0 0.0
      %1737 = vmatprep.subr.mxu0 0.0
      %1738 = vmatpush2.msra.mxu0 0.0
      %1739 = vmatprep.subr.mxu0 0.0
      %1740 = vmatpush2.msra.mxu0 0.0
      %1741 = vmatprep.subr.mxu0 0.0
      %1742 = vmatpush2.msra.mxu0 0.0
      %1743 = vmatprep.subr.mxu0 0.0
      %1744 = vmatpush2.msra.mxu0 0.0
      %1745 = vmatprep.subr.mxu0 0.0
      %1746 = vmatpush2.msra.mxu0 0.0
      %1747 = vmatprep.mubr.f32.mxu0 0.0
      %1748 = vmatmul.mubr.f32.gmra.mxu0 %v1601
      %v1749 = vpop.f32.mrf.mxu0
      %v1750 = vadd.f32 0.0, %v1749
      %v1751 = vpop.f32.mrf.mxu0
      %1752 = vmatprep.mubr.f32.mxu0 0.0
      %1753 = vmatmul.mubr.f32.gmra.mxu0 %v1604
      %v1754 = vpop.f32.mrf.mxu0
      %v1755 = vadd.f32 0.0, %v1754
      %v1756 = vpop.f32.mrf.mxu0
      %1757 = vdwg.mxu0
      %v1758 = vadd.f32 %v1579, %v1673
      %v1759 = vadd.f32 %v1580, %v1675
      %v1760 = vadd.f32 %v1581, %v1750
      %v1761 = vadd.f32 %v1582, %v1679
      %v1762 = vadd.f32 %v1583, %v1681
      %v1763 = vadd.f32 %v1584, %v1755
      %v1764 = vld [vmem:[%s2] sm:$0xff]
      %v1765 = vld [vmem:[%s2 + $0x8] sm:$0xff]
      %1767 = vset.pattern.permute.xlu0 0
      %1768 = vperm.xlu0 %1767, %v1764
      %v1769 = vpop.permute.xlu0 %1768
      %1772 = vset.pattern.permute.xlu0 0
      %1773 = vperm.xlu0 %1772, %v1765
      %v1774 = vpop.permute.xlu0 %1773
      %v1776 = vadd.f32 %v1758, %v1769
      %v1777 = vadd.f32 %v1759, %v1769
      %v1778 = vadd.f32 %v1760, %v1769
      %v1779 = vadd.f32 %v1761, %v1774
      %v1780 = vadd.f32 %v1762, %v1774
      %v1781 = vadd.f32 %v1763, %v1774
      %1782 = vst [vmem:[%s170] sm:$0xff] %v1776
      %1783 = vst [vmem:[%s170 + $0x8] sm:$0xff] %v1777
      %1784 = vst [vmem:[%s170 + $0x10] sm:$0xff] %v1778
      %1785 = vst [vmem:[%s170 + $0x18] sm:$0xff] %v1779
      %1786 = vst [vmem:[%s170 + $0x20] sm:$0xff] %v1780
      %1787 = vst [vmem:[%s170 + $0x28] sm:$0xff] %v1781
      %p1788 = scmp.lt.s32.totalorder %s14, 1
      %s1789 = scalar_select %p1788, %s14, 1
      %s1790 = smul.addr %s1789, 6
      %s1791 = smul.addr %s1790, 8
      %s1792 = scalar_lea.vmem %s3, %s1791
      // Predicated region
      $region33: #{complex_conv2d_forward.1} parent=31 // pred_check
        %p1793 = pneg %p100
      $region34: #{complex_conv2d_forward.1} parent=31 // pred_check_branch
        %1795 = sbr.rel (%p1793) target = $region36
      $region35: #{complex_conv2d_forward.1} parent=31 // pred_region
        _
      $region36: #{complex_conv2d_forward.1} parent=31 // pred_fallthru
        _
    $region32: #{complex_conv2d_forward.1} parent=5 // pred_fallthru
      _
    %p1796 = scmp.le.s32.totalorder 2, %s9
    // Predicated region
    $region37: #{complex_conv2d_forward.1} parent=5 // pred_check
      %p1797 = pneg %p1796
    $region38: #{complex_conv2d_forward.1} parent=5 // pred_check_branch
      %1799 = sbr.rel (%p1797) target = $region40
    $region39: #{complex_conv2d_forward.1} parent=5 // pred_region
      %s1800 = ssub.s32 %s9, 2
      // Predicated region
      $region41: #{complex_conv2d_forward.1} parent=39 // pred_check
        %p1801 = pneg %p106
      $region42: #{complex_conv2d_forward.1} parent=39 // pred_check_branch
        %1803 = sbr.rel (%p1801) target = $region44
      $region43: #{complex_conv2d_forward.1} parent=39 // pred_region
        %p1804 = scmp.lt.s32.totalorder %s15, 1
        %s1805 = scalar_select %p1804, %s15, 1
        %s1806 = smul.addr %s1805, 6
        %s1807 = smul.addr %s1806, 8
        %s1808 = scalar_lea.vmem %s3, %s1807
      $region44: #{complex_conv2d_forward.1} parent=39 // pred_fallthru
        _
    $region40: #{complex_conv2d_forward.1} parent=5 // pred_fallthru
      _
  $region6: #{complex_conv2d_forward.1} parent=0 // loop_footer
    %s13 = sadd.s32 1, %s9
  $region7: #{complex_conv2d_forward.1} parent=0 // loop_footer_branch
    %8 = sbr.rel target = $region3
  $region8: #{complex_conv2d_forward.1} parent=0 // loop_exit
    _

</llo_original>
